<compile_context>
chip_gen: v7x
topology: tpu7x:2x2x1
jax: 0.10.0
libtpu: 0.0.40
codegen_flags: <defaults>
</compile_context>

<pallas_src>
import functools

import jax
import jax.numpy as jnp
from jax.experimental import pallas as pl
from jax.experimental.pallas import tpu as pltpu

EMBED_DIM = 300
MAX_NORM = 1.0


def _round_up(x, m):
    return ((x + m - 1) // m) * m


# ---------------------------------------------------------------------------
# Kernel A: batched embedding-row gather + torch-style max_norm renorm.
# Runs once (grid=(1,)).  Indices are scalar-prefetched into SMEM; the embedding
# table stays in HBM (memory_space=pl.ANY) and N row DMAs land in one VMEM slab
# that is renormalized in a single vectorized pass.
# ---------------------------------------------------------------------------
def _gather_renorm_kernel(n_rows, n_pad,
                          idx_ref,    # SMEM [n_rows] int32 (scalar prefetch)
                          emb_hbm,    # HBM  [vocab, 300] f32
                          x_out,      # VMEM [n_pad, 300] f32 (output)
                          x_vmem,     # VMEM [n_pad, 300] f32 (scratch)
                          sems):      # DMA semaphores [n_pad]
    # TODO(synk): for N in the hundreds+, dedupe repeated ids and coalesce rows into
    # fewer, larger DMAs; at N ~ 8-16 per-row 1.2 KB copies are negligible.
    copies = []
    for i in range(n_pad):
        # padded rows re-fetch row idx[0]; their outputs are sliced off in the wrapper
        src_i = idx_ref[i] if i < n_rows else idx_ref[0]
        cp = pltpu.make_async_copy(
            emb_hbm.at[pl.ds(src_i, 1), :],
            x_vmem.at[pl.ds(i, 1), :],
            sems.at[i],
        )
        cp.start()
        copies.append(cp)
    for cp in copies:
        cp.wait()

    # torch.nn.Embedding(max_norm=1): rows with L2 norm > 1 are scaled by
    # max_norm / (norm + 1e-7) at lookup time.
    x = x_vmem[...]
    norm = jnp.sqrt(jnp.sum(x * x, axis=-1, keepdims=True))      # [n_pad, 1]
    scale = jnp.where(norm > MAX_NORM, MAX_NORM / (norm + 1e-7), 1.0)
    x_out[...] = x * scale


def _gather_renorm(indices, emb_table, n_pad):
    n = indices.shape[0]
    kernel = functools.partial(_gather_renorm_kernel, n, n_pad)
    return pl.pallas_call(
        kernel,
        out_shape=jax.ShapeDtypeStruct((n_pad, EMBED_DIM), jnp.float32),
        grid_spec=pltpu.PrefetchScalarGridSpec(
            num_scalar_prefetch=1,                               # indices -> SMEM
            grid=(1,),
            in_specs=[pl.BlockSpec(memory_space=pl.ANY)],        # emb table stays in HBM
            out_specs=pl.BlockSpec((n_pad, EMBED_DIM), lambda i, idx: (0, 0)),
            scratch_shapes=[
                pltpu.VMEM((n_pad, EMBED_DIM), jnp.float32),
                pltpu.SemaphoreType.DMA((n_pad,)),
            ],
        ),
        compiler_params=pltpu.CompilerParams(
            dimension_semantics=("arbitrary",)),
    )(indices, emb_table)


# ---------------------------------------------------------------------------
# Kernel B: streamed GEMM.  Grid over vocab tiles ("parallel"); the bf16 weight
# tile [300, TN] is double-buffered by BlockSpec; output tiles are lane-dense.
# ---------------------------------------------------------------------------
def _linear_kernel(x_ref, w_ref, b_ref, out_ref):
    # [n_pad, 300] (f32 -> bf16) @ [300, TN] (bf16) with f32 accumulation on the MXU.
    out = jnp.dot(x_ref[...].astype(jnp.bfloat16), w_ref[...],
                  preferred_element_type=jnp.float32)
    out_ref[...] = (out + b_ref[...]).astype(out_ref.dtype)


def skipgram_forward(indices, emb_table, w_t, bias, *, tile_n=2048):
    """indices:[N] int32, emb_table:[V,300] f32, w_t:[300,V] (=linear.weight.T), bias:[1,V]."""
    n = indices.shape[0]
    assert n > 0, "need at least one input word"
    assert indices.dtype == jnp.int32, "indices must be int32 for SMEM scalar prefetch"
    vocab, d = emb_table.shape
    assert d == EMBED_DIM and w_t.shape == (EMBED_DIM, vocab) and bias.shape == (1, vocab)

    n_pad = _round_up(n, 16)                      # bf16-native sublane count for x
    vocab_pad = _round_up(vocab, 128)             # lane-dense last dim
    tn = min(_round_up(tile_n, 128), vocab_pad)   # vocab tile (multiple of 128)
    vocab_pad = _round_up(vocab_pad, tn)          # make the grid exact
    num_tiles = vocab_pad // tn

    # Pallas kernel A: gather + max_norm renorm of the N embedding rows.
    x_norm = _gather_renorm(indices, emb_table, n_pad)              # [n_pad, 300] f32

    # Stream the linear weight in bf16; bias / accumulation / output stay f32.
    w_p = jnp.zeros((EMBED_DIM, vocab_pad), jnp.bfloat16)
    w_p = w_p.at[:, :vocab].set(w_t.astype(jnp.bfloat16))
    b_p = jnp.zeros((1, vocab_pad), jnp.float32).at[:, :vocab].set(bias)

    # VMEM budget: double-buffered bf16 weight + bias + f32 output tiles + x input.
    vmem_bytes = (2 * _round_up(EMBED_DIM, 16) * tn * 2             # weight tiles (bf16)
                  + 2 * 8 * tn * 4                                  # bias tiles
                  + 2 * n_pad * tn * 4                              # output tiles
                  + 2 * n_pad * _round_up(EMBED_DIM, 128) * 4)      # x input
    vmem_limit = min(max(int(vmem_bytes * 1.5) + (4 << 20), 16 << 20), 64 << 20)

    cost = pl.CostEstimate(
        flops=2 * n_pad * EMBED_DIM * vocab_pad,
        transcendentals=0,
        bytes_accessed=(EMBED_DIM * vocab_pad * 2 + vocab_pad * 4
                        + n_pad * vocab_pad * 4 + n_pad * EMBED_DIM * 4),
    )

    out_padded = pl.pallas_call(
        _linear_kernel,
        out_shape=jax.ShapeDtypeStruct((n_pad, vocab_pad), jnp.float32),
        grid_spec=pltpu.PrefetchScalarGridSpec(
            num_scalar_prefetch=0,
            grid=(num_tiles,),
            in_specs=[
                pl.BlockSpec((n_pad, EMBED_DIM), lambda j: (0, 0)),  # x (grid-invariant)
                pl.BlockSpec((EMBED_DIM, tn), lambda j: (0, j)),     # streamed bf16 weight tile
                pl.BlockSpec((1, tn), lambda j: (0, j)),             # bias tile
            ],
            out_specs=pl.BlockSpec((n_pad, tn), lambda j: (0, j)),
        ),
        compiler_params=pltpu.CompilerParams(
            dimension_semantics=("parallel",),      # v7x megacore: both TCs stream W
            vmem_limit_bytes=vmem_limit),
        cost_estimate=cost,
    )(x_norm, w_p, b_p)

    out = out_padded
    if vocab_pad != vocab:
        out = out[:, :vocab]
    if n_pad != n:
        out = out[:n]
    return out


def skipgram_reference(indices, emb_table, w_t, bias):
    rows = emb_table[indices]
    norms = jnp.sqrt(jnp.sum(rows * rows, axis=-1, keepdims=True))
    scale = jnp.where(norms > MAX_NORM, MAX_NORM / (norms + 1e-7), 1.0)
    rows = rows * scale
    return rows @ w_t + bias


if __name__ == "__main__":
    vocab_size = 4000     # pads to 4096 -> exercises 2 vocab tiles of 2048
    n_words = 8           # number of input word ids (padded to 16 rows in-kernel)

    key = jax.random.PRNGKey(0)
    k_emb, k_w, k_b, k_idx = jax.random.split(key, 4)

    # Deterministic synthetic parameters (shapes from the module __init__).
    emb_table = jax.random.normal(k_emb, (vocab_size, EMBED_DIM), jnp.float32)
    bound = 1.0 / (EMBED_DIM ** 0.5)
    linear_w = jax.random.uniform(k_w, (vocab_size, EMBED_DIM), jnp.float32,
                                  minval=-bound, maxval=bound)
    linear_b = jax.random.uniform(k_b, (1, vocab_size), jnp.float32,
                                  minval=-bound, maxval=bound)
    w_t = linear_w.T                                   # [300, vocab]

    indices = jax.random.randint(k_idx, (n_words,), 0, vocab_size, dtype=jnp.int32)

    out = skipgram_forward(indices, emb_table, w_t, linear_b)
    out = jax.block_until_ready(out)

    ref = skipgram_reference(indices, emb_table, w_t, linear_b)
    assert out.shape == (n_words, vocab_size), out.shape
    # Tolerance loosened vs. the f32 version: the weight (and x) are streamed /
    # multiplied in bf16 with f32 accumulation.
    assert jnp.allclose(out, ref, atol=1e-2, rtol=1e-2), (out, ref)
    print("KERNEL_OK")
</pallas_src>

<mosaic_0001>
module attributes {stable_mosaic.version = 11 : i64} {
  func.func @_gather_renorm_kernel(%arg0: i32, %arg1: memref<8xi32, #tpu.memory_space<smem>>, %arg2: memref<4000x300xf32, #tpu.memory_space<any>>, %arg3: memref<16x300xf32, #tpu.memory_space<vmem>>, %arg4: memref<16x300xf32, #tpu.memory_space<vmem>>, %arg5: memref<16x!tpu.dma_semaphore, #tpu.memory_space<semaphore_mem>>) attributes {dimension_semantics = [#tpu.dimension_semantics<arbitrary>], iteration_bounds = array<i64: 1>, scalar_prefetch = 1 : i64, scratch_operands = 2 : i64, tpu.core_type = #tpu.core_type<tc>, window_params = [{}, {pipeline_mode = #tpu.pipeline_mode<synchronous>, transform_indices = @transform_1, window_bounds = array<i64: 16, 300>}]} {
    %c0 = arith.constant 0 : index
    %0 = memref.load %arg1[%c0] : memref<8xi32, #tpu.memory_space<smem>>
    %c0_i32 = arith.constant 0 : i32
    %c0_i32_0 = arith.constant 0 : i32
    %1 = tpu.memref_slice %arg2[%0, %c0_i32_0] : memref<4000x300xf32, #tpu.memory_space<any>> -> memref<1x300xf32, #tpu.memory_space<any>>
    %c0_i32_1 = arith.constant 0 : i32
    %c0_i32_2 = arith.constant 0 : i32
    %2 = tpu.memref_slice %arg4[%c0_i32_1, %c0_i32_2] : memref<16x300xf32, #tpu.memory_space<vmem>> -> memref<1x300xf32, #tpu.memory_space<vmem>>
    %3 = tpu.memref_slice %arg5[%c0_i32] : memref<16x!tpu.dma_semaphore, #tpu.memory_space<semaphore_mem>> -> memref<1x!tpu.dma_semaphore, #tpu.memory_space<semaphore_mem>>
    %4 = tpu.memref_squeeze %3 : memref<1x!tpu.dma_semaphore, #tpu.memory_space<semaphore_mem>> -> memref<!tpu.dma_semaphore, #tpu.memory_space<semaphore_mem>>
    tpu.enqueue_dma source(%1 : memref<1x300xf32, #tpu.memory_space<any>>) target(%2 : memref<1x300xf32, #tpu.memory_space<vmem>>) target_semaphore(%4 : memref<!tpu.dma_semaphore, #tpu.memory_space<semaphore_mem>>)
    %c1 = arith.constant 1 : index
    %5 = memref.load %arg1[%c1] : memref<8xi32, #tpu.memory_space<smem>>
    %c1_i32 = arith.constant 1 : i32
    %c0_i32_3 = arith.constant 0 : i32
    %6 = tpu.memref_slice %arg2[%5, %c0_i32_3] : memref<4000x300xf32, #tpu.memory_space<any>> -> memref<1x300xf32, #tpu.memory_space<any>>
    %c1_i32_4 = arith.constant 1 : i32
    %c0_i32_5 = arith.constant 0 : i32
    %7 = tpu.memref_slice %arg4[%c1_i32_4, %c0_i32_5] : memref<16x300xf32, #tpu.memory_space<vmem>> -> memref<1x300xf32, #tpu.memory_space<vmem>>
    %8 = tpu.memref_slice %arg5[%c1_i32] : memref<16x!tpu.dma_semaphore, #tpu.memory_space<semaphore_mem>> -> memref<1x!tpu.dma_semaphore, #tpu.memory_space<semaphore_mem>>
    %9 = tpu.memref_squeeze %8 : memref<1x!tpu.dma_semaphore, #tpu.memory_space<semaphore_mem>> -> memref<!tpu.dma_semaphore, #tpu.memory_space<semaphore_mem>>
    tpu.enqueue_dma source(%6 : memref<1x300xf32, #tpu.memory_space<any>>) target(%7 : memref<1x300xf32, #tpu.memory_space<vmem>>) target_semaphore(%9 : memref<!tpu.dma_semaphore, #tpu.memory_space<semaphore_mem>>)
    %c2 = arith.constant 2 : index
    %10 = memref.load %arg1[%c2] : memref<8xi32, #tpu.memory_space<smem>>
    %c2_i32 = arith.constant 2 : i32
    %c0_i32_6 = arith.constant 0 : i32
    %11 = tpu.memref_slice %arg2[%10, %c0_i32_6] : memref<4000x300xf32, #tpu.memory_space<any>> -> memref<1x300xf32, #tpu.memory_space<any>>
    %c2_i32_7 = arith.constant 2 : i32
    %c0_i32_8 = arith.constant 0 : i32
    %12 = tpu.memref_slice %arg4[%c2_i32_7, %c0_i32_8] : memref<16x300xf32, #tpu.memory_space<vmem>> -> memref<1x300xf32, #tpu.memory_space<vmem>>
    %13 = tpu.memref_slice %arg5[%c2_i32] : memref<16x!tpu.dma_semaphore, #tpu.memory_space<semaphore_mem>> -> memref<1x!tpu.dma_semaphore, #tpu.memory_space<semaphore_mem>>
    %14 = tpu.memref_squeeze %13 : memref<1x!tpu.dma_semaphore, #tpu.memory_space<semaphore_mem>> -> memref<!tpu.dma_semaphore, #tpu.memory_space<semaphore_mem>>
    tpu.enqueue_dma source(%11 : memref<1x300xf32, #tpu.memory_space<any>>) target(%12 : memref<1x300xf32, #tpu.memory_space<vmem>>) target_semaphore(%14 : memref<!tpu.dma_semaphore, #tpu.memory_space<semaphore_mem>>)
    %c3 = arith.constant 3 : index
    %15 = memref.load %arg1[%c3] : memref<8xi32, #tpu.memory_space<smem>>
    %c3_i32 = arith.constant 3 : i32
    %c0_i32_9 = arith.constant 0 : i32
    %16 = tpu.memref_slice %arg2[%15, %c0_i32_9] : memref<4000x300xf32, #tpu.memory_space<any>> -> memref<1x300xf32, #tpu.memory_space<any>>
    %c3_i32_10 = arith.constant 3 : i32
    %c0_i32_11 = arith.constant 0 : i32
    %17 = tpu.memref_slice %arg4[%c3_i32_10, %c0_i32_11] : memref<16x300xf32, #tpu.memory_space<vmem>> -> memref<1x300xf32, #tpu.memory_space<vmem>>
    %18 = tpu.memref_slice %arg5[%c3_i32] : memref<16x!tpu.dma_semaphore, #tpu.memory_space<semaphore_mem>> -> memref<1x!tpu.dma_semaphore, #tpu.memory_space<semaphore_mem>>
    %19 = tpu.memref_squeeze %18 : memref<1x!tpu.dma_semaphore, #tpu.memory_space<semaphore_mem>> -> memref<!tpu.dma_semaphore, #tpu.memory_space<semaphore_mem>>
    tpu.enqueue_dma source(%16 : memref<1x300xf32, #tpu.memory_space<any>>) target(%17 : memref<1x300xf32, #tpu.memory_space<vmem>>) target_semaphore(%19 : memref<!tpu.dma_semaphore, #tpu.memory_space<semaphore_mem>>)
    %c4 = arith.constant 4 : index
    %20 = memref.load %arg1[%c4] : memref<8xi32, #tpu.memory_space<smem>>
    %c4_i32 = arith.constant 4 : i32
    %c0_i32_12 = arith.constant 0 : i32
    %21 = tpu.memref_slice %arg2[%20, %c0_i32_12] : memref<4000x300xf32, #tpu.memory_space<any>> -> memref<1x300xf32, #tpu.memory_space<any>>
    %c4_i32_13 = arith.constant 4 : i32
    %c0_i32_14 = arith.constant 0 : i32
    %22 = tpu.memref_slice %arg4[%c4_i32_13, %c0_i32_14] : memref<16x300xf32, #tpu.memory_space<vmem>> -> memref<1x300xf32, #tpu.memory_space<vmem>>
    %23 = tpu.memref_slice %arg5[%c4_i32] : memref<16x!tpu.dma_semaphore, #tpu.memory_space<semaphore_mem>> -> memref<1x!tpu.dma_semaphore, #tpu.memory_space<semaphore_mem>>
    %24 = tpu.memref_squeeze %23 : memref<1x!tpu.dma_semaphore, #tpu.memory_space<semaphore_mem>> -> memref<!tpu.dma_semaphore, #tpu.memory_space<semaphore_mem>>
    tpu.enqueue_dma source(%21 : memref<1x300xf32, #tpu.memory_space<any>>) target(%22 : memref<1x300xf32, #tpu.memory_space<vmem>>) target_semaphore(%24 : memref<!tpu.dma_semaphore, #tpu.memory_space<semaphore_mem>>)
    %c5 = arith.constant 5 : index
    %25 = memref.load %arg1[%c5] : memref<8xi32, #tpu.memory_space<smem>>
    %c5_i32 = arith.constant 5 : i32
    %c0_i32_15 = arith.constant 0 : i32
    %26 = tpu.memref_slice %arg2[%25, %c0_i32_15] : memref<4000x300xf32, #tpu.memory_space<any>> -> memref<1x300xf32, #tpu.memory_space<any>>
    %c5_i32_16 = arith.constant 5 : i32
    %c0_i32_17 = arith.constant 0 : i32
    %27 = tpu.memref_slice %arg4[%c5_i32_16, %c0_i32_17] : memref<16x300xf32, #tpu.memory_space<vmem>> -> memref<1x300xf32, #tpu.memory_space<vmem>>
    %28 = tpu.memref_slice %arg5[%c5_i32] : memref<16x!tpu.dma_semaphore, #tpu.memory_space<semaphore_mem>> -> memref<1x!tpu.dma_semaphore, #tpu.memory_space<semaphore_mem>>
    %29 = tpu.memref_squeeze %28 : memref<1x!tpu.dma_semaphore, #tpu.memory_space<semaphore_mem>> -> memref<!tpu.dma_semaphore, #tpu.memory_space<semaphore_mem>>
    tpu.enqueue_dma source(%26 : memref<1x300xf32, #tpu.memory_space<any>>) target(%27 : memref<1x300xf32, #tpu.memory_space<vmem>>) target_semaphore(%29 : memref<!tpu.dma_semaphore, #tpu.memory_space<semaphore_mem>>)
    %c6 = arith.constant 6 : index
    %30 = memref.load %arg1[%c6] : memref<8xi32, #tpu.memory_space<smem>>
    %c6_i32 = arith.constant 6 : i32
    %c0_i32_18 = arith.constant 0 : i32
    %31 = tpu.memref_slice %arg2[%30, %c0_i32_18] : memref<4000x300xf32, #tpu.memory_space<any>> -> memref<1x300xf32, #tpu.memory_space<any>>
    %c6_i32_19 = arith.constant 6 : i32
    %c0_i32_20 = arith.constant 0 : i32
    %32 = tpu.memref_slice %arg4[%c6_i32_19, %c0_i32_20] : memref<16x300xf32, #tpu.memory_space<vmem>> -> memref<1x300xf32, #tpu.memory_space<vmem>>
    %33 = tpu.memref_slice %arg5[%c6_i32] : memref<16x!tpu.dma_semaphore, #tpu.memory_space<semaphore_mem>> -> memref<1x!tpu.dma_semaphore, #tpu.memory_space<semaphore_mem>>
    %34 = tpu.memref_squeeze %33 : memref<1x!tpu.dma_semaphore, #tpu.memory_space<semaphore_mem>> -> memref<!tpu.dma_semaphore, #tpu.memory_space<semaphore_mem>>
    tpu.enqueue_dma source(%31 : memref<1x300xf32, #tpu.memory_space<any>>) target(%32 : memref<1x300xf32, #tpu.memory_space<vmem>>) target_semaphore(%34 : memref<!tpu.dma_semaphore, #tpu.memory_space<semaphore_mem>>)
    %c7 = arith.constant 7 : index
    %35 = memref.load %arg1[%c7] : memref<8xi32, #tpu.memory_space<smem>>
    %c7_i32 = arith.constant 7 : i32
    %c0_i32_21 = arith.constant 0 : i32
    %36 = tpu.memref_slice %arg2[%35, %c0_i32_21] : memref<4000x300xf32, #tpu.memory_space<any>> -> memref<1x300xf32, #tpu.memory_space<any>>
    %c7_i32_22 = arith.constant 7 : i32
    %c0_i32_23 = arith.constant 0 : i32
    %37 = tpu.memref_slice %arg4[%c7_i32_22, %c0_i32_23] : memref<16x300xf32, #tpu.memory_space<vmem>> -> memref<1x300xf32, #tpu.memory_space<vmem>>
    %38 = tpu.memref_slice %arg5[%c7_i32] : memref<16x!tpu.dma_semaphore, #tpu.memory_space<semaphore_mem>> -> memref<1x!tpu.dma_semaphore, #tpu.memory_space<semaphore_mem>>
    %39 = tpu.memref_squeeze %38 : memref<1x!tpu.dma_semaphore, #tpu.memory_space<semaphore_mem>> -> memref<!tpu.dma_semaphore, #tpu.memory_space<semaphore_mem>>
    tpu.enqueue_dma source(%36 : memref<1x300xf32, #tpu.memory_space<any>>) target(%37 : memref<1x300xf32, #tpu.memory_space<vmem>>) target_semaphore(%39 : memref<!tpu.dma_semaphore, #tpu.memory_space<semaphore_mem>>)
    %c0_24 = arith.constant 0 : index
    %40 = memref.load %arg1[%c0_24] : memref<8xi32, #tpu.memory_space<smem>>
    %c8_i32 = arith.constant 8 : i32
    %c0_i32_25 = arith.constant 0 : i32
    %41 = tpu.memref_slice %arg2[%40, %c0_i32_25] : memref<4000x300xf32, #tpu.memory_space<any>> -> memref<1x300xf32, #tpu.memory_space<any>>
    %c8_i32_26 = arith.constant 8 : i32
    %c0_i32_27 = arith.constant 0 : i32
    %42 = tpu.memref_slice %arg4[%c8_i32_26, %c0_i32_27] : memref<16x300xf32, #tpu.memory_space<vmem>> -> memref<1x300xf32, #tpu.memory_space<vmem>>
    %43 = tpu.memref_slice %arg5[%c8_i32] : memref<16x!tpu.dma_semaphore, #tpu.memory_space<semaphore_mem>> -> memref<1x!tpu.dma_semaphore, #tpu.memory_space<semaphore_mem>>
    %44 = tpu.memref_squeeze %43 : memref<1x!tpu.dma_semaphore, #tpu.memory_space<semaphore_mem>> -> memref<!tpu.dma_semaphore, #tpu.memory_space<semaphore_mem>>
    tpu.enqueue_dma source(%41 : memref<1x300xf32, #tpu.memory_space<any>>) target(%42 : memref<1x300xf32, #tpu.memory_space<vmem>>) target_semaphore(%44 : memref<!tpu.dma_semaphore, #tpu.memory_space<semaphore_mem>>)
    %c0_28 = arith.constant 0 : index
    %45 = memref.load %arg1[%c0_28] : memref<8xi32, #tpu.memory_space<smem>>
    %c9_i32 = arith.constant 9 : i32
    %c0_i32_29 = arith.constant 0 : i32
    %46 = tpu.memref_slice %arg2[%45, %c0_i32_29] : memref<4000x300xf32, #tpu.memory_space<any>> -> memref<1x300xf32, #tpu.memory_space<any>>
    %c9_i32_30 = arith.constant 9 : i32
    %c0_i32_31 = arith.constant 0 : i32
    %47 = tpu.memref_slice %arg4[%c9_i32_30, %c0_i32_31] : memref<16x300xf32, #tpu.memory_space<vmem>> -> memref<1x300xf32, #tpu.memory_space<vmem>>
    %48 = tpu.memref_slice %arg5[%c9_i32] : memref<16x!tpu.dma_semaphore, #tpu.memory_space<semaphore_mem>> -> memref<1x!tpu.dma_semaphore, #tpu.memory_space<semaphore_mem>>
    %49 = tpu.memref_squeeze %48 : memref<1x!tpu.dma_semaphore, #tpu.memory_space<semaphore_mem>> -> memref<!tpu.dma_semaphore, #tpu.memory_space<semaphore_mem>>
    tpu.enqueue_dma source(%46 : memref<1x300xf32, #tpu.memory_space<any>>) target(%47 : memref<1x300xf32, #tpu.memory_space<vmem>>) target_semaphore(%49 : memref<!tpu.dma_semaphore, #tpu.memory_space<semaphore_mem>>)
    %c0_32 = arith.constant 0 : index
    %50 = memref.load %arg1[%c0_32] : memref<8xi32, #tpu.memory_space<smem>>
    %c10_i32 = arith.constant 10 : i32
    %c0_i32_33 = arith.constant 0 : i32
    %51 = tpu.memref_slice %arg2[%50, %c0_i32_33] : memref<4000x300xf32, #tpu.memory_space<any>> -> memref<1x300xf32, #tpu.memory_space<any>>
    %c10_i32_34 = arith.constant 10 : i32
    %c0_i32_35 = arith.constant 0 : i32
    %52 = tpu.memref_slice %arg4[%c10_i32_34, %c0_i32_35] : memref<16x300xf32, #tpu.memory_space<vmem>> -> memref<1x300xf32, #tpu.memory_space<vmem>>
    %53 = tpu.memref_slice %arg5[%c10_i32] : memref<16x!tpu.dma_semaphore, #tpu.memory_space<semaphore_mem>> -> memref<1x!tpu.dma_semaphore, #tpu.memory_space<semaphore_mem>>
    %54 = tpu.memref_squeeze %53 : memref<1x!tpu.dma_semaphore, #tpu.memory_space<semaphore_mem>> -> memref<!tpu.dma_semaphore, #tpu.memory_space<semaphore_mem>>
    tpu.enqueue_dma source(%51 : memref<1x300xf32, #tpu.memory_space<any>>) target(%52 : memref<1x300xf32, #tpu.memory_space<vmem>>) target_semaphore(%54 : memref<!tpu.dma_semaphore, #tpu.memory_space<semaphore_mem>>)
    %c0_36 = arith.constant 0 : index
    %55 = memref.load %arg1[%c0_36] : memref<8xi32, #tpu.memory_space<smem>>
    %c11_i32 = arith.constant 11 : i32
    %c0_i32_37 = arith.constant 0 : i32
    %56 = tpu.memref_slice %arg2[%55, %c0_i32_37] : memref<4000x300xf32, #tpu.memory_space<any>> -> memref<1x300xf32, #tpu.memory_space<any>>
    %c11_i32_38 = arith.constant 11 : i32
    %c0_i32_39 = arith.constant 0 : i32
    %57 = tpu.memref_slice %arg4[%c11_i32_38, %c0_i32_39] : memref<16x300xf32, #tpu.memory_space<vmem>> -> memref<1x300xf32, #tpu.memory_space<vmem>>
    %58 = tpu.memref_slice %arg5[%c11_i32] : memref<16x!tpu.dma_semaphore, #tpu.memory_space<semaphore_mem>> -> memref<1x!tpu.dma_semaphore, #tpu.memory_space<semaphore_mem>>
    %59 = tpu.memref_squeeze %58 : memref<1x!tpu.dma_semaphore, #tpu.memory_space<semaphore_mem>> -> memref<!tpu.dma_semaphore, #tpu.memory_space<semaphore_mem>>
    tpu.enqueue_dma source(%56 : memref<1x300xf32, #tpu.memory_space<any>>) target(%57 : memref<1x300xf32, #tpu.memory_space<vmem>>) target_semaphore(%59 : memref<!tpu.dma_semaphore, #tpu.memory_space<semaphore_mem>>)
    %c0_40 = arith.constant 0 : index
    %60 = memref.load %arg1[%c0_40] : memref<8xi32, #tpu.memory_space<smem>>
    %c12_i32 = arith.constant 12 : i32
    %c0_i32_41 = arith.constant 0 : i32
    %61 = tpu.memref_slice %arg2[%60, %c0_i32_41] : memref<4000x300xf32, #tpu.memory_space<any>> -> memref<1x300xf32, #tpu.memory_space<any>>
    %c12_i32_42 = arith.constant 12 : i32
    %c0_i32_43 = arith.constant 0 : i32
    %62 = tpu.memref_slice %arg4[%c12_i32_42, %c0_i32_43] : memref<16x300xf32, #tpu.memory_space<vmem>> -> memref<1x300xf32, #tpu.memory_space<vmem>>
    %63 = tpu.memref_slice %arg5[%c12_i32] : memref<16x!tpu.dma_semaphore, #tpu.memory_space<semaphore_mem>> -> memref<1x!tpu.dma_semaphore, #tpu.memory_space<semaphore_mem>>
    %64 = tpu.memref_squeeze %63 : memref<1x!tpu.dma_semaphore, #tpu.memory_space<semaphore_mem>> -> memref<!tpu.dma_semaphore, #tpu.memory_space<semaphore_mem>>
    tpu.enqueue_dma source(%61 : memref<1x300xf32, #tpu.memory_space<any>>) target(%62 : memref<1x300xf32, #tpu.memory_space<vmem>>) target_semaphore(%64 : memref<!tpu.dma_semaphore, #tpu.memory_space<semaphore_mem>>)
    %c0_44 = arith.constant 0 : index
    %65 = memref.load %arg1[%c0_44] : memref<8xi32, #tpu.memory_space<smem>>
    %c13_i32 = arith.constant 13 : i32
    %c0_i32_45 = arith.constant 0 : i32
    %66 = tpu.memref_slice %arg2[%65, %c0_i32_45] : memref<4000x300xf32, #tpu.memory_space<any>> -> memref<1x300xf32, #tpu.memory_space<any>>
    %c13_i32_46 = arith.constant 13 : i32
    %c0_i32_47 = arith.constant 0 : i32
    %67 = tpu.memref_slice %arg4[%c13_i32_46, %c0_i32_47] : memref<16x300xf32, #tpu.memory_space<vmem>> -> memref<1x300xf32, #tpu.memory_space<vmem>>
    %68 = tpu.memref_slice %arg5[%c13_i32] : memref<16x!tpu.dma_semaphore, #tpu.memory_space<semaphore_mem>> -> memref<1x!tpu.dma_semaphore, #tpu.memory_space<semaphore_mem>>
    %69 = tpu.memref_squeeze %68 : memref<1x!tpu.dma_semaphore, #tpu.memory_space<semaphore_mem>> -> memref<!tpu.dma_semaphore, #tpu.memory_space<semaphore_mem>>
    tpu.enqueue_dma source(%66 : memref<1x300xf32, #tpu.memory_space<any>>) target(%67 : memref<1x300xf32, #tpu.memory_space<vmem>>) target_semaphore(%69 : memref<!tpu.dma_semaphore, #tpu.memory_space<semaphore_mem>>)
    %c0_48 = arith.constant 0 : index
    %70 = memref.load %arg1[%c0_48] : memref<8xi32, #tpu.memory_space<smem>>
    %c14_i32 = arith.constant 14 : i32
    %c0_i32_49 = arith.constant 0 : i32
    %71 = tpu.memref_slice %arg2[%70, %c0_i32_49] : memref<4000x300xf32, #tpu.memory_space<any>> -> memref<1x300xf32, #tpu.memory_space<any>>
    %c14_i32_50 = arith.constant 14 : i32
    %c0_i32_51 = arith.constant 0 : i32
    %72 = tpu.memref_slice %arg4[%c14_i32_50, %c0_i32_51] : memref<16x300xf32, #tpu.memory_space<vmem>> -> memref<1x300xf32, #tpu.memory_space<vmem>>
    %73 = tpu.memref_slice %arg5[%c14_i32] : memref<16x!tpu.dma_semaphore, #tpu.memory_space<semaphore_mem>> -> memref<1x!tpu.dma_semaphore, #tpu.memory_space<semaphore_mem>>
    %74 = tpu.memref_squeeze %73 : memref<1x!tpu.dma_semaphore, #tpu.memory_space<semaphore_mem>> -> memref<!tpu.dma_semaphore, #tpu.memory_space<semaphore_mem>>
    tpu.enqueue_dma source(%71 : memref<1x300xf32, #tpu.memory_space<any>>) target(%72 : memref<1x300xf32, #tpu.memory_space<vmem>>) target_semaphore(%74 : memref<!tpu.dma_semaphore, #tpu.memory_space<semaphore_mem>>)
    %c0_52 = arith.constant 0 : index
    %75 = memref.load %arg1[%c0_52] : memref<8xi32, #tpu.memory_space<smem>>
    %c15_i32 = arith.constant 15 : i32
    %c0_i32_53 = arith.constant 0 : i32
    %76 = tpu.memref_slice %arg2[%75, %c0_i32_53] : memref<4000x300xf32, #tpu.memory_space<any>> -> memref<1x300xf32, #tpu.memory_space<any>>
    %c15_i32_54 = arith.constant 15 : i32
    %c0_i32_55 = arith.constant 0 : i32
    %77 = tpu.memref_slice %arg4[%c15_i32_54, %c0_i32_55] : memref<16x300xf32, #tpu.memory_space<vmem>> -> memref<1x300xf32, #tpu.memory_space<vmem>>
    %78 = tpu.memref_slice %arg5[%c15_i32] : memref<16x!tpu.dma_semaphore, #tpu.memory_space<semaphore_mem>> -> memref<1x!tpu.dma_semaphore, #tpu.memory_space<semaphore_mem>>
    %79 = tpu.memref_squeeze %78 : memref<1x!tpu.dma_semaphore, #tpu.memory_space<semaphore_mem>> -> memref<!tpu.dma_semaphore, #tpu.memory_space<semaphore_mem>>
    tpu.enqueue_dma source(%76 : memref<1x300xf32, #tpu.memory_space<any>>) target(%77 : memref<1x300xf32, #tpu.memory_space<vmem>>) target_semaphore(%79 : memref<!tpu.dma_semaphore, #tpu.memory_space<semaphore_mem>>)
    %c0_i32_56 = arith.constant 0 : i32
    %c0_i32_57 = arith.constant 0 : i32
    %80 = tpu.memref_slice %arg2[%0, %c0_i32_57] : memref<4000x300xf32, #tpu.memory_space<any>> -> memref<1x300xf32, #tpu.memory_space<any>>
    %c0_i32_58 = arith.constant 0 : i32
    %c0_i32_59 = arith.constant 0 : i32
    %81 = tpu.memref_slice %arg4[%c0_i32_58, %c0_i32_59] : memref<16x300xf32, #tpu.memory_space<vmem>> -> memref<1x300xf32, #tpu.memory_space<vmem>>
    %82 = tpu.memref_slice %arg5[%c0_i32_56] : memref<16x!tpu.dma_semaphore, #tpu.memory_space<semaphore_mem>> -> memref<1x!tpu.dma_semaphore, #tpu.memory_space<semaphore_mem>>
    %83 = tpu.memref_squeeze %82 : memref<1x!tpu.dma_semaphore, #tpu.memory_space<semaphore_mem>> -> memref<!tpu.dma_semaphore, #tpu.memory_space<semaphore_mem>>
    tpu.wait_dma2 semaphore(%83 : memref<!tpu.dma_semaphore, #tpu.memory_space<semaphore_mem>>) src(%80 : memref<1x300xf32, #tpu.memory_space<any>>) dst(%81 : memref<1x300xf32, #tpu.memory_space<vmem>>)
    %c1_i32_60 = arith.constant 1 : i32
    %c0_i32_61 = arith.constant 0 : i32
    %84 = tpu.memref_slice %arg2[%5, %c0_i32_61] : memref<4000x300xf32, #tpu.memory_space<any>> -> memref<1x300xf32, #tpu.memory_space<any>>
    %c1_i32_62 = arith.constant 1 : i32
    %c0_i32_63 = arith.constant 0 : i32
    %85 = tpu.memref_slice %arg4[%c1_i32_62, %c0_i32_63] : memref<16x300xf32, #tpu.memory_space<vmem>> -> memref<1x300xf32, #tpu.memory_space<vmem>>
    %86 = tpu.memref_slice %arg5[%c1_i32_60] : memref<16x!tpu.dma_semaphore, #tpu.memory_space<semaphore_mem>> -> memref<1x!tpu.dma_semaphore, #tpu.memory_space<semaphore_mem>>
    %87 = tpu.memref_squeeze %86 : memref<1x!tpu.dma_semaphore, #tpu.memory_space<semaphore_mem>> -> memref<!tpu.dma_semaphore, #tpu.memory_space<semaphore_mem>>
    tpu.wait_dma2 semaphore(%87 : memref<!tpu.dma_semaphore, #tpu.memory_space<semaphore_mem>>) src(%84 : memref<1x300xf32, #tpu.memory_space<any>>) dst(%85 : memref<1x300xf32, #tpu.memory_space<vmem>>)
    %c2_i32_64 = arith.constant 2 : i32
    %c0_i32_65 = arith.constant 0 : i32
    %88 = tpu.memref_slice %arg2[%10, %c0_i32_65] : memref<4000x300xf32, #tpu.memory_space<any>> -> memref<1x300xf32, #tpu.memory_space<any>>
    %c2_i32_66 = arith.constant 2 : i32
    %c0_i32_67 = arith.constant 0 : i32
    %89 = tpu.memref_slice %arg4[%c2_i32_66, %c0_i32_67] : memref<16x300xf32, #tpu.memory_space<vmem>> -> memref<1x300xf32, #tpu.memory_space<vmem>>
    %90 = tpu.memref_slice %arg5[%c2_i32_64] : memref<16x!tpu.dma_semaphore, #tpu.memory_space<semaphore_mem>> -> memref<1x!tpu.dma_semaphore, #tpu.memory_space<semaphore_mem>>
    %91 = tpu.memref_squeeze %90 : memref<1x!tpu.dma_semaphore, #tpu.memory_space<semaphore_mem>> -> memref<!tpu.dma_semaphore, #tpu.memory_space<semaphore_mem>>
    tpu.wait_dma2 semaphore(%91 : memref<!tpu.dma_semaphore, #tpu.memory_space<semaphore_mem>>) src(%88 : memref<1x300xf32, #tpu.memory_space<any>>) dst(%89 : memref<1x300xf32, #tpu.memory_space<vmem>>)
    %c3_i32_68 = arith.constant 3 : i32
    %c0_i32_69 = arith.constant 0 : i32
    %92 = tpu.memref_slice %arg2[%15, %c0_i32_69] : memref<4000x300xf32, #tpu.memory_space<any>> -> memref<1x300xf32, #tpu.memory_space<any>>
    %c3_i32_70 = arith.constant 3 : i32
    %c0_i32_71 = arith.constant 0 : i32
    %93 = tpu.memref_slice %arg4[%c3_i32_70, %c0_i32_71] : memref<16x300xf32, #tpu.memory_space<vmem>> -> memref<1x300xf32, #tpu.memory_space<vmem>>
    %94 = tpu.memref_slice %arg5[%c3_i32_68] : memref<16x!tpu.dma_semaphore, #tpu.memory_space<semaphore_mem>> -> memref<1x!tpu.dma_semaphore, #tpu.memory_space<semaphore_mem>>
    %95 = tpu.memref_squeeze %94 : memref<1x!tpu.dma_semaphore, #tpu.memory_space<semaphore_mem>> -> memref<!tpu.dma_semaphore, #tpu.memory_space<semaphore_mem>>
    tpu.wait_dma2 semaphore(%95 : memref<!tpu.dma_semaphore, #tpu.memory_space<semaphore_mem>>) src(%92 : memref<1x300xf32, #tpu.memory_space<any>>) dst(%93 : memref<1x300xf32, #tpu.memory_space<vmem>>)
    %c4_i32_72 = arith.constant 4 : i32
    %c0_i32_73 = arith.constant 0 : i32
    %96 = tpu.memref_slice %arg2[%20, %c0_i32_73] : memref<4000x300xf32, #tpu.memory_space<any>> -> memref<1x300xf32, #tpu.memory_space<any>>
    %c4_i32_74 = arith.constant 4 : i32
    %c0_i32_75 = arith.constant 0 : i32
    %97 = tpu.memref_slice %arg4[%c4_i32_74, %c0_i32_75] : memref<16x300xf32, #tpu.memory_space<vmem>> -> memref<1x300xf32, #tpu.memory_space<vmem>>
    %98 = tpu.memref_slice %arg5[%c4_i32_72] : memref<16x!tpu.dma_semaphore, #tpu.memory_space<semaphore_mem>> -> memref<1x!tpu.dma_semaphore, #tpu.memory_space<semaphore_mem>>
    %99 = tpu.memref_squeeze %98 : memref<1x!tpu.dma_semaphore, #tpu.memory_space<semaphore_mem>> -> memref<!tpu.dma_semaphore, #tpu.memory_space<semaphore_mem>>
    tpu.wait_dma2 semaphore(%99 : memref<!tpu.dma_semaphore, #tpu.memory_space<semaphore_mem>>) src(%96 : memref<1x300xf32, #tpu.memory_space<any>>) dst(%97 : memref<1x300xf32, #tpu.memory_space<vmem>>)
    %c5_i32_76 = arith.constant 5 : i32
    %c0_i32_77 = arith.constant 0 : i32
    %100 = tpu.memref_slice %arg2[%25, %c0_i32_77] : memref<4000x300xf32, #tpu.memory_space<any>> -> memref<1x300xf32, #tpu.memory_space<any>>
    %c5_i32_78 = arith.constant 5 : i32
    %c0_i32_79 = arith.constant 0 : i32
    %101 = tpu.memref_slice %arg4[%c5_i32_78, %c0_i32_79] : memref<16x300xf32, #tpu.memory_space<vmem>> -> memref<1x300xf32, #tpu.memory_space<vmem>>
    %102 = tpu.memref_slice %arg5[%c5_i32_76] : memref<16x!tpu.dma_semaphore, #tpu.memory_space<semaphore_mem>> -> memref<1x!tpu.dma_semaphore, #tpu.memory_space<semaphore_mem>>
    %103 = tpu.memref_squeeze %102 : memref<1x!tpu.dma_semaphore, #tpu.memory_space<semaphore_mem>> -> memref<!tpu.dma_semaphore, #tpu.memory_space<semaphore_mem>>
    tpu.wait_dma2 semaphore(%103 : memref<!tpu.dma_semaphore, #tpu.memory_space<semaphore_mem>>) src(%100 : memref<1x300xf32, #tpu.memory_space<any>>) dst(%101 : memref<1x300xf32, #tpu.memory_space<vmem>>)
    %c6_i32_80 = arith.constant 6 : i32
    %c0_i32_81 = arith.constant 0 : i32
    %104 = tpu.memref_slice %arg2[%30, %c0_i32_81] : memref<4000x300xf32, #tpu.memory_space<any>> -> memref<1x300xf32, #tpu.memory_space<any>>
    %c6_i32_82 = arith.constant 6 : i32
    %c0_i32_83 = arith.constant 0 : i32
    %105 = tpu.memref_slice %arg4[%c6_i32_82, %c0_i32_83] : memref<16x300xf32, #tpu.memory_space<vmem>> -> memref<1x300xf32, #tpu.memory_space<vmem>>
    %106 = tpu.memref_slice %arg5[%c6_i32_80] : memref<16x!tpu.dma_semaphore, #tpu.memory_space<semaphore_mem>> -> memref<1x!tpu.dma_semaphore, #tpu.memory_space<semaphore_mem>>
    %107 = tpu.memref_squeeze %106 : memref<1x!tpu.dma_semaphore, #tpu.memory_space<semaphore_mem>> -> memref<!tpu.dma_semaphore, #tpu.memory_space<semaphore_mem>>
    tpu.wait_dma2 semaphore(%107 : memref<!tpu.dma_semaphore, #tpu.memory_space<semaphore_mem>>) src(%104 : memref<1x300xf32, #tpu.memory_space<any>>) dst(%105 : memref<1x300xf32, #tpu.memory_space<vmem>>)
    %c7_i32_84 = arith.constant 7 : i32
    %c0_i32_85 = arith.constant 0 : i32
    %108 = tpu.memref_slice %arg2[%35, %c0_i32_85] : memref<4000x300xf32, #tpu.memory_space<any>> -> memref<1x300xf32, #tpu.memory_space<any>>
    %c7_i32_86 = arith.constant 7 : i32
    %c0_i32_87 = arith.constant 0 : i32
    %109 = tpu.memref_slice %arg4[%c7_i32_86, %c0_i32_87] : memref<16x300xf32, #tpu.memory_space<vmem>> -> memref<1x300xf32, #tpu.memory_space<vmem>>
    %110 = tpu.memref_slice %arg5[%c7_i32_84] : memref<16x!tpu.dma_semaphore, #tpu.memory_space<semaphore_mem>> -> memref<1x!tpu.dma_semaphore, #tpu.memory_space<semaphore_mem>>
    %111 = tpu.memref_squeeze %110 : memref<1x!tpu.dma_semaphore, #tpu.memory_space<semaphore_mem>> -> memref<!tpu.dma_semaphore, #tpu.memory_space<semaphore_mem>>
    tpu.wait_dma2 semaphore(%111 : memref<!tpu.dma_semaphore, #tpu.memory_space<semaphore_mem>>) src(%108 : memref<1x300xf32, #tpu.memory_space<any>>) dst(%109 : memref<1x300xf32, #tpu.memory_space<vmem>>)
    %c8_i32_88 = arith.constant 8 : i32
    %c0_i32_89 = arith.constant 0 : i32
    %112 = tpu.memref_slice %arg2[%40, %c0_i32_89] : memref<4000x300xf32, #tpu.memory_space<any>> -> memref<1x300xf32, #tpu.memory_space<any>>
    %c8_i32_90 = arith.constant 8 : i32
    %c0_i32_91 = arith.constant 0 : i32
    %113 = tpu.memref_slice %arg4[%c8_i32_90, %c0_i32_91] : memref<16x300xf32, #tpu.memory_space<vmem>> -> memref<1x300xf32, #tpu.memory_space<vmem>>
    %114 = tpu.memref_slice %arg5[%c8_i32_88] : memref<16x!tpu.dma_semaphore, #tpu.memory_space<semaphore_mem>> -> memref<1x!tpu.dma_semaphore, #tpu.memory_space<semaphore_mem>>
    %115 = tpu.memref_squeeze %114 : memref<1x!tpu.dma_semaphore, #tpu.memory_space<semaphore_mem>> -> memref<!tpu.dma_semaphore, #tpu.memory_space<semaphore_mem>>
    tpu.wait_dma2 semaphore(%115 : memref<!tpu.dma_semaphore, #tpu.memory_space<semaphore_mem>>) src(%112 : memref<1x300xf32, #tpu.memory_space<any>>) dst(%113 : memref<1x300xf32, #tpu.memory_space<vmem>>)
    %c9_i32_92 = arith.constant 9 : i32
    %c0_i32_93 = arith.constant 0 : i32
    %116 = tpu.memref_slice %arg2[%45, %c0_i32_93] : memref<4000x300xf32, #tpu.memory_space<any>> -> memref<1x300xf32, #tpu.memory_space<any>>
    %c9_i32_94 = arith.constant 9 : i32
    %c0_i32_95 = arith.constant 0 : i32
    %117 = tpu.memref_slice %arg4[%c9_i32_94, %c0_i32_95] : memref<16x300xf32, #tpu.memory_space<vmem>> -> memref<1x300xf32, #tpu.memory_space<vmem>>
    %118 = tpu.memref_slice %arg5[%c9_i32_92] : memref<16x!tpu.dma_semaphore, #tpu.memory_space<semaphore_mem>> -> memref<1x!tpu.dma_semaphore, #tpu.memory_space<semaphore_mem>>
    %119 = tpu.memref_squeeze %118 : memref<1x!tpu.dma_semaphore, #tpu.memory_space<semaphore_mem>> -> memref<!tpu.dma_semaphore, #tpu.memory_space<semaphore_mem>>
    tpu.wait_dma2 semaphore(%119 : memref<!tpu.dma_semaphore, #tpu.memory_space<semaphore_mem>>) src(%116 : memref<1x300xf32, #tpu.memory_space<any>>) dst(%117 : memref<1x300xf32, #tpu.memory_space<vmem>>)
    %c10_i32_96 = arith.constant 10 : i32
    %c0_i32_97 = arith.constant 0 : i32
    %120 = tpu.memref_slice %arg2[%50, %c0_i32_97] : memref<4000x300xf32, #tpu.memory_space<any>> -> memref<1x300xf32, #tpu.memory_space<any>>
    %c10_i32_98 = arith.constant 10 : i32
    %c0_i32_99 = arith.constant 0 : i32
    %121 = tpu.memref_slice %arg4[%c10_i32_98, %c0_i32_99] : memref<16x300xf32, #tpu.memory_space<vmem>> -> memref<1x300xf32, #tpu.memory_space<vmem>>
    %122 = tpu.memref_slice %arg5[%c10_i32_96] : memref<16x!tpu.dma_semaphore, #tpu.memory_space<semaphore_mem>> -> memref<1x!tpu.dma_semaphore, #tpu.memory_space<semaphore_mem>>
    %123 = tpu.memref_squeeze %122 : memref<1x!tpu.dma_semaphore, #tpu.memory_space<semaphore_mem>> -> memref<!tpu.dma_semaphore, #tpu.memory_space<semaphore_mem>>
    tpu.wait_dma2 semaphore(%123 : memref<!tpu.dma_semaphore, #tpu.memory_space<semaphore_mem>>) src(%120 : memref<1x300xf32, #tpu.memory_space<any>>) dst(%121 : memref<1x300xf32, #tpu.memory_space<vmem>>)
    %c11_i32_100 = arith.constant 11 : i32
    %c0_i32_101 = arith.constant 0 : i32
    %124 = tpu.memref_slice %arg2[%55, %c0_i32_101] : memref<4000x300xf32, #tpu.memory_space<any>> -> memref<1x300xf32, #tpu.memory_space<any>>
    %c11_i32_102 = arith.constant 11 : i32
    %c0_i32_103 = arith.constant 0 : i32
    %125 = tpu.memref_slice %arg4[%c11_i32_102, %c0_i32_103] : memref<16x300xf32, #tpu.memory_space<vmem>> -> memref<1x300xf32, #tpu.memory_space<vmem>>
    %126 = tpu.memref_slice %arg5[%c11_i32_100] : memref<16x!tpu.dma_semaphore, #tpu.memory_space<semaphore_mem>> -> memref<1x!tpu.dma_semaphore, #tpu.memory_space<semaphore_mem>>
    %127 = tpu.memref_squeeze %126 : memref<1x!tpu.dma_semaphore, #tpu.memory_space<semaphore_mem>> -> memref<!tpu.dma_semaphore, #tpu.memory_space<semaphore_mem>>
    tpu.wait_dma2 semaphore(%127 : memref<!tpu.dma_semaphore, #tpu.memory_space<semaphore_mem>>) src(%124 : memref<1x300xf32, #tpu.memory_space<any>>) dst(%125 : memref<1x300xf32, #tpu.memory_space<vmem>>)
    %c12_i32_104 = arith.constant 12 : i32
    %c0_i32_105 = arith.constant 0 : i32
    %128 = tpu.memref_slice %arg2[%60, %c0_i32_105] : memref<4000x300xf32, #tpu.memory_space<any>> -> memref<1x300xf32, #tpu.memory_space<any>>
    %c12_i32_106 = arith.constant 12 : i32
    %c0_i32_107 = arith.constant 0 : i32
    %129 = tpu.memref_slice %arg4[%c12_i32_106, %c0_i32_107] : memref<16x300xf32, #tpu.memory_space<vmem>> -> memref<1x300xf32, #tpu.memory_space<vmem>>
    %130 = tpu.memref_slice %arg5[%c12_i32_104] : memref<16x!tpu.dma_semaphore, #tpu.memory_space<semaphore_mem>> -> memref<1x!tpu.dma_semaphore, #tpu.memory_space<semaphore_mem>>
    %131 = tpu.memref_squeeze %130 : memref<1x!tpu.dma_semaphore, #tpu.memory_space<semaphore_mem>> -> memref<!tpu.dma_semaphore, #tpu.memory_space<semaphore_mem>>
    tpu.wait_dma2 semaphore(%131 : memref<!tpu.dma_semaphore, #tpu.memory_space<semaphore_mem>>) src(%128 : memref<1x300xf32, #tpu.memory_space<any>>) dst(%129 : memref<1x300xf32, #tpu.memory_space<vmem>>)
    %c13_i32_108 = arith.constant 13 : i32
    %c0_i32_109 = arith.constant 0 : i32
    %132 = tpu.memref_slice %arg2[%65, %c0_i32_109] : memref<4000x300xf32, #tpu.memory_space<any>> -> memref<1x300xf32, #tpu.memory_space<any>>
    %c13_i32_110 = arith.constant 13 : i32
    %c0_i32_111 = arith.constant 0 : i32
    %133 = tpu.memref_slice %arg4[%c13_i32_110, %c0_i32_111] : memref<16x300xf32, #tpu.memory_space<vmem>> -> memref<1x300xf32, #tpu.memory_space<vmem>>
    %134 = tpu.memref_slice %arg5[%c13_i32_108] : memref<16x!tpu.dma_semaphore, #tpu.memory_space<semaphore_mem>> -> memref<1x!tpu.dma_semaphore, #tpu.memory_space<semaphore_mem>>
    %135 = tpu.memref_squeeze %134 : memref<1x!tpu.dma_semaphore, #tpu.memory_space<semaphore_mem>> -> memref<!tpu.dma_semaphore, #tpu.memory_space<semaphore_mem>>
    tpu.wait_dma2 semaphore(%135 : memref<!tpu.dma_semaphore, #tpu.memory_space<semaphore_mem>>) src(%132 : memref<1x300xf32, #tpu.memory_space<any>>) dst(%133 : memref<1x300xf32, #tpu.memory_space<vmem>>)
    %c14_i32_112 = arith.constant 14 : i32
    %c0_i32_113 = arith.constant 0 : i32
    %136 = tpu.memref_slice %arg2[%70, %c0_i32_113] : memref<4000x300xf32, #tpu.memory_space<any>> -> memref<1x300xf32, #tpu.memory_space<any>>
    %c14_i32_114 = arith.constant 14 : i32
    %c0_i32_115 = arith.constant 0 : i32
    %137 = tpu.memref_slice %arg4[%c14_i32_114, %c0_i32_115] : memref<16x300xf32, #tpu.memory_space<vmem>> -> memref<1x300xf32, #tpu.memory_space<vmem>>
    %138 = tpu.memref_slice %arg5[%c14_i32_112] : memref<16x!tpu.dma_semaphore, #tpu.memory_space<semaphore_mem>> -> memref<1x!tpu.dma_semaphore, #tpu.memory_space<semaphore_mem>>
    %139 = tpu.memref_squeeze %138 : memref<1x!tpu.dma_semaphore, #tpu.memory_space<semaphore_mem>> -> memref<!tpu.dma_semaphore, #tpu.memory_space<semaphore_mem>>
    tpu.wait_dma2 semaphore(%139 : memref<!tpu.dma_semaphore, #tpu.memory_space<semaphore_mem>>) src(%136 : memref<1x300xf32, #tpu.memory_space<any>>) dst(%137 : memref<1x300xf32, #tpu.memory_space<vmem>>)
    %c15_i32_116 = arith.constant 15 : i32
    %c0_i32_117 = arith.constant 0 : i32
    %140 = tpu.memref_slice %arg2[%75, %c0_i32_117] : memref<4000x300xf32, #tpu.memory_space<any>> -> memref<1x300xf32, #tpu.memory_space<any>>
    %c15_i32_118 = arith.constant 15 : i32
    %c0_i32_119 = arith.constant 0 : i32
    %141 = tpu.memref_slice %arg4[%c15_i32_118, %c0_i32_119] : memref<16x300xf32, #tpu.memory_space<vmem>> -> memref<1x300xf32, #tpu.memory_space<vmem>>
    %142 = tpu.memref_slice %arg5[%c15_i32_116] : memref<16x!tpu.dma_semaphore, #tpu.memory_space<semaphore_mem>> -> memref<1x!tpu.dma_semaphore, #tpu.memory_space<semaphore_mem>>
    %143 = tpu.memref_squeeze %142 : memref<1x!tpu.dma_semaphore, #tpu.memory_space<semaphore_mem>> -> memref<!tpu.dma_semaphore, #tpu.memory_space<semaphore_mem>>
    tpu.wait_dma2 semaphore(%143 : memref<!tpu.dma_semaphore, #tpu.memory_space<semaphore_mem>>) src(%140 : memref<1x300xf32, #tpu.memory_space<any>>) dst(%141 : memref<1x300xf32, #tpu.memory_space<vmem>>)
    %c0_120 = arith.constant 0 : index
    %c0_121 = arith.constant 0 : index
    %144 = vector.load %arg4[%c0_120, %c0_121] : memref<16x300xf32, #tpu.memory_space<vmem>>, vector<16x300xf32>
    %145 = arith.mulf %144, %144 : vector<16x300xf32>
    %cst = arith.constant dense<0.000000e+00> : vector<16xf32>
    %146 = vector.multi_reduction <add>, %145, %cst [1] : vector<16x300xf32> to vector<16xf32>
    %147 = vector.shape_cast %146 : vector<16xf32> to vector<16x1xf32>
    %148 = math.sqrt %147 : vector<16x1xf32>
    %cst_122 = arith.constant 1.000000e+00 : f32
    %149 = vector.broadcast %cst_122 : f32 to vector<16x1xf32>
    %150 = arith.cmpf ogt, %148, %149 : vector<16x1xf32>
    %cst_123 = arith.constant 1.000000e-07 : f32
    %151 = vector.broadcast %cst_123 : f32 to vector<16x1xf32>
    %152 = arith.addf %148, %151 : vector<16x1xf32>
    %cst_124 = arith.constant 1.000000e+00 : f32
    %153 = vector.broadcast %cst_124 : f32 to vector<16x1xf32>
    %154 = arith.divf %153, %152 : vector<16x1xf32>
    %cst_125 = arith.constant 1.000000e+00 : f32
    %155 = vector.broadcast %cst_125 : f32 to vector<16x1xf32>
    %156 = arith.select %150, %154, %155 : vector<16x1xi1>, vector<16x1xf32>
    %157 = vector.broadcast %156 : vector<16x1xf32> to vector<16x300xf32>
    %158 = arith.mulf %144, %157 : vector<16x300xf32>
    %c0_126 = arith.constant 0 : index
    %c0_127 = arith.constant 0 : index
    %159 = vector.load %arg3[%c0_126, %c0_127] : memref<16x300xf32, #tpu.memory_space<vmem>>, vector<16x300xf32>
    tpu.vector_store %arg3[%c0_126, %c0_127], %158 {strides = array<i32>} : memref<16x300xf32, #tpu.memory_space<vmem>>, vector<16x300xf32>,
    return
  }
  func.func @transform_1(%arg0: i32, %arg1: memref<8xi32, #tpu.memory_space<smem>>) -> (i32, i32) {
    %c0_i32 = arith.constant 0 : i32
    %c0_i32_0 = arith.constant 0 : i32
    %c0_i32_1 = arith.constant 0 : i32
    return %c0_i32, %c0_i32_0 : i32, i32
  }
}

</mosaic_0001>

<llo_original>
// kernel: tpu_custom_call.1
$region0: #{tpu_custom_call.1}
  #allocation0 [shape = 'u32[]', space=smem, size = 0x4, offset = 0x4, fixed_abs, tag = 'smem constant byte address 0x4 - core index']
  #allocation1 [shape = 'u32[144,128]{1,0:T(1,128)}', space=vmem, size = 0x12000, scoped, tag = 'internal scratch']
  #allocation2 [shape = 'f32[16,300]{1,0:T(8,128)}', space=vmem, size = 0x6000, scoped, tag = 'scratch operand']
  #allocation3 [shape = 's32[16]{0}', space=sflag, size = 0x40, scoped, tag = 'scratch operand']
  #allocation4 [shape = 's32[1]{0}', space=sflag, size = 0x4, scoped, tag = 'scoped memory for tpu_custom_call.1']
  #allocation5 [shape = 'u8[512]{0}', space=smem, size = 0x200, scoped, tag = 'prefetched SMEM operand 0']
  #allocation8 [shape = 's32[]', space=sflag, size = 0x4, offset = 0, fixed_abs, tag = 'sflag constant byte address 0x0 - dummy sync flag']
  #allocation9 [shape = 's32[]', space=sflag, size = 0x4, offset = 0, fixed_abs, tag = 'sflag constant byte address 0x0 - dummy sync flag']
  #allocation10 [shape = 's32[]', space=sflag, size = 0x4, offset = 0, fixed_abs, tag = 'sflag constant byte address 0x0 - dummy sync flag']
  #allocation11 [shape = 's32[]', space=sflag, size = 0x4, offset = 0, fixed_abs, tag = 'sflag constant byte address 0x0 - dummy sync flag']
  #allocation12 [shape = 's32[]', space=sflag, size = 0x4, offset = 0, fixed_abs, tag = 'sflag constant byte address 0x0 - dummy sync flag']
  #allocation13 [shape = 's32[]', space=sflag, size = 0x4, offset = 0, fixed_abs, tag = 'sflag constant byte address 0x0 - dummy sync flag']
  #allocation14 [shape = 's32[]', space=sflag, size = 0x4, offset = 0, fixed_abs, tag = 'sflag constant byte address 0x0 - dummy sync flag']
  #allocation15 [shape = 's32[]', space=sflag, size = 0x4, offset = 0, fixed_abs, tag = 'sflag constant byte address 0x0 - dummy sync flag']
  #allocation16 [shape = 's32[]', space=sflag, size = 0x4, offset = 0, fixed_abs, tag = 'sflag constant byte address 0x0 - dummy sync flag']
  #allocation17 [shape = 's32[]', space=sflag, size = 0x4, offset = 0, fixed_abs, tag = 'sflag constant byte address 0x0 - dummy sync flag']
  #allocation18 [shape = 's32[]', space=sflag, size = 0x4, offset = 0, fixed_abs, tag = 'sflag constant byte address 0x0 - dummy sync flag']
  #allocation19 [shape = 's32[]', space=sflag, size = 0x4, offset = 0, fixed_abs, tag = 'sflag constant byte address 0x0 - dummy sync flag']
  #allocation20 [shape = 's32[]', space=sflag, size = 0x4, offset = 0, fixed_abs, tag = 'sflag constant byte address 0x0 - dummy sync flag']
  #allocation21 [shape = 's32[]', space=sflag, size = 0x4, offset = 0, fixed_abs, tag = 'sflag constant byte address 0x0 - dummy sync flag']
  #allocation22 [shape = 's32[]', space=sflag, size = 0x4, offset = 0, fixed_abs, tag = 'sflag constant byte address 0x0 - dummy sync flag']
  #allocation23 [shape = 's32[]', space=sflag, size = 0x4, offset = 0, fixed_abs, tag = 'sflag constant byte address 0x0 - dummy sync flag']
  %s0 = inlined_call_operand.vmem [shape: s32[8], index: 0, kind: input, shape index: {}]
  %s1 = inlined_call_operand.vmem [shape: f32[4000,300], index: 1, kind: input, shape index: {}]
  %s2 = inlined_call_operand.hbm [shape: f32[16,300], index: 2, kind: output, shape index: {}]
  %s3 = sld [smem:[#allocation0]]
  $region490: #{tpu_custom_call.1} parent=0
    _
  %s5 = ssub.s32 1, %s3
  %s6 = scalar_select 0, %s5, %s3
  %s7 = sshll.u32 %s0, 4
  %s8 = int_to_ptr.vmem [resolvable:$true] %s7
  %10 = dma.vmem_to_smem %s8, 16, [#allocation5], [#allocation4]
  %11 = dma.done [#allocation4], 16
  %12 = sfence
  $region1: #{tpu_custom_call.1} parent=0
    #allocation6 [shape = 'u8[24576]{0}', space=vmem, size = 0x6000, scoped, tag = 'output window, operand 0, single buffered']
    #allocation7 [shape = 's32[1]{0}', space=sflag, size = 0x4, scoped, tag = 'scoped memory for tpu_custom_call.1']
    %13 = vsyncpa [#allocation7], 0
    %s14 = sld [smem:[#allocation5]]
    %s15 = sshrl.u32 %s14, 3
    %s16 = sand.u32 %s14, 7
    %s17 = smul.u32 %s15, 24
    %s18 = sadd.s32 %s16, %s17
    %s19 = scalar_lea.vmem %s1, %s18
    %p21 = scmp.lt.u32.totalorder 1, 8
    %p22 = pneg %p21
    // Predicated region
    $region2: #{tpu_custom_call.1} parent=1 // pred_check
      _
    $region3: #{tpu_custom_call.1} parent=1 // pred_check_branch
      %24 = sbr.rel (%p21) target = $region5
    $region4: #{tpu_custom_call.1} parent=1 // pred_region
      %s43 = sand.u32 1, 7
      %p44 = scmp.eq.s32.totalorder %s43, 0
      %p45 = pneg %p44
      // Predicated region
      $region17: #{tpu_custom_call.1} parent=4 // pred_check
        _
      $region18: #{tpu_custom_call.1} parent=4 // pred_check_branch
        %47 = sbr.rel (%p44) target = $region20
      $region19: #{tpu_custom_call.1} parent=4 // pred_region
        %s48 = sand.u32 1, 7
        %s49 = ssub.s32 1, %s48
        %s50 = scalar_lea.vmem %s19, %s49
        %s51 = ssub.s32 1, %s48
        %s52 = scalar_lea.vmem [#allocation2], %s51
        %s53 = sshllo.u32 0, %s48
        loop: start=0, step=1, limit=1
        $region21: #{tpu_custom_call.1} parent=19 // loop_pre_header
          _
        $region22: #{tpu_custom_call.1} parent=19 // loop_header
          %s55 = sphi 0, %s59
          %p56 = scmp.ge.s32.totalorder %s55, 1
          %s60 = sphi %s50, %s50
          %s61 = sphi %s52, %s52
        $region23: #{tpu_custom_call.1} parent=19 // loop_header_branch
          %58 = sbr.rel (%p56) target = $region27
        $region24: #{tpu_custom_call.1} parent=19 // loop_body
          %v62 = vld [vmem:[%s60] sm:%s53]
          %63 = vst [vmem:[%s61] sm:%s53] %v62
          %v64 = vld [vmem:[%s60 + $0x8] sm:%s53]
          %65 = vst [vmem:[%s61 + $0x8] sm:%s53] %v64
          %v66 = vld [vmem:[%s60 + $0x10] sm:%s53]
          %67 = vst [vmem:[%s61 + $0x10] sm:%s53] %v66
        $region25: #{tpu_custom_call.1} parent=19 // loop_footer
          %s59 = sadd.s32 1, %s55
        $region26: #{tpu_custom_call.1} parent=19 // loop_footer_branch
          %54 = sbr.rel target = $region22
        $region27: #{tpu_custom_call.1} parent=19 // loop_exit
          _
      $region20: #{tpu_custom_call.1} parent=4 // pred_fallthru
        _
    $region5: #{tpu_custom_call.1} parent=1 // pred_fallthru
      _
    // Predicated region
    $region6: #{tpu_custom_call.1} parent=1 // pred_check
      %p25 = pneg %p21
    $region7: #{tpu_custom_call.1} parent=1 // pred_check_branch
      %27 = sbr.rel (%p25) target = $region9
    $region8: #{tpu_custom_call.1} parent=1 // pred_region
      %s28 = sshllo.u32 0, 1
      loop: start=0, step=1, limit=1
      $region10: #{tpu_custom_call.1} parent=8 // loop_pre_header
        _
      $region11: #{tpu_custom_call.1} parent=8 // loop_header
        %s30 = sphi 0, %s34
        %p31 = scmp.ge.s32.totalorder %s30, 1
        %s35 = sphi %s19, %s19
        %s36 = sphi [#allocation2], [#allocation2]
      $region12: #{tpu_custom_call.1} parent=8 // loop_header_branch
        %33 = sbr.rel (%p31) target = $region16
      $region13: #{tpu_custom_call.1} parent=8 // loop_body
        %v37 = vld [vmem:[%s35] sm:%s28]
        %38 = vst [vmem:[%s36] sm:%s28] %v37
        %v39 = vld [vmem:[%s35 + $0x8] sm:%s28]
        %40 = vst [vmem:[%s36 + $0x8] sm:%s28] %v39
        %v41 = vld [vmem:[%s35 + $0x10] sm:%s28]
        %42 = vst [vmem:[%s36 + $0x10] sm:%s28] %v41
      $region14: #{tpu_custom_call.1} parent=8 // loop_footer
        %s34 = sadd.s32 1, %s30
      $region15: #{tpu_custom_call.1} parent=8 // loop_footer_branch
        %29 = sbr.rel target = $region11
      $region16: #{tpu_custom_call.1} parent=8 // loop_exit
        _
    $region9: #{tpu_custom_call.1} parent=1 // pred_fallthru
      _
    // Predicated region
    $region28: #{tpu_custom_call.1} parent=1 // pred_check
      _
    $region29: #{tpu_custom_call.1} parent=1 // pred_check_branch
      %70 = sbr.rel (0) target = $region31
    $region30: #{tpu_custom_call.1} parent=1 // pred_region
      %71 = vsyncadd [#allocation3], 48
    $region31: #{tpu_custom_call.1} parent=1 // pred_fallthru
      _
    %s72 = sld [smem:[#allocation5 + $0x1]]
    %s73 = sshrl.u32 %s72, 3
    %s74 = sand.u32 %s72, 7
    %s75 = smul.u32 %s73, 24
    %s76 = sadd.s32 %s74, %s75
    %s77 = scalar_lea.vmem %s1, %s76
    %s78 = scalar_lea.vmem [#allocation2], 1
    %s79 = scalar_lea.sflag [#allocation3], 1
    %p81 = scmp.lt.u32.totalorder 1, 8
    %p82 = pneg %p81
    // Predicated region
    $region32: #{tpu_custom_call.1} parent=1 // pred_check
      _
    $region33: #{tpu_custom_call.1} parent=1 // pred_check_branch
      %84 = sbr.rel (%p81) target = $region35
    $region34: #{tpu_custom_call.1} parent=1 // pred_region
      %s103 = sand.u32 1, 7
      %p104 = scmp.eq.s32.totalorder %s103, 0
      %p105 = pneg %p104
      // Predicated region
      $region47: #{tpu_custom_call.1} parent=34 // pred_check
        _
      $region48: #{tpu_custom_call.1} parent=34 // pred_check_branch
        %107 = sbr.rel (%p104) target = $region50
      $region49: #{tpu_custom_call.1} parent=34 // pred_region
        %s108 = sand.u32 1, 7
        %s109 = ssub.s32 1, %s108
        %s110 = scalar_lea.vmem %s77, %s109
        %s111 = ssub.s32 1, %s108
        %s112 = scalar_lea.vmem %s78, %s111 [#allocation2]
        %s113 = sshllo.u32 0, %s108
        loop: start=0, step=1, limit=1
        $region51: #{tpu_custom_call.1} parent=49 // loop_pre_header
          _
        $region52: #{tpu_custom_call.1} parent=49 // loop_header
          %s115 = sphi 0, %s119
          %p116 = scmp.ge.s32.totalorder %s115, 1
          %s120 = sphi %s110, %s110
          %s121 = sphi %s112, %s112
        $region53: #{tpu_custom_call.1} parent=49 // loop_header_branch
          %118 = sbr.rel (%p116) target = $region57
        $region54: #{tpu_custom_call.1} parent=49 // loop_body
          %v122 = vld [vmem:[%s120] sm:%s113]
          %123 = vst [vmem:[%s121] sm:%s113] %v122
          %v124 = vld [vmem:[%s120 + $0x8] sm:%s113]
          %125 = vst [vmem:[%s121 + $0x8] sm:%s113] %v124
          %v126 = vld [vmem:[%s120 + $0x10] sm:%s113]
          %127 = vst [vmem:[%s121 + $0x10] sm:%s113] %v126
        $region55: #{tpu_custom_call.1} parent=49 // loop_footer
          %s119 = sadd.s32 1, %s115
        $region56: #{tpu_custom_call.1} parent=49 // loop_footer_branch
          %114 = sbr.rel target = $region52
        $region57: #{tpu_custom_call.1} parent=49 // loop_exit
          _
      $region50: #{tpu_custom_call.1} parent=34 // pred_fallthru
        _
    $region35: #{tpu_custom_call.1} parent=1 // pred_fallthru
      _
    // Predicated region
    $region36: #{tpu_custom_call.1} parent=1 // pred_check
      %p85 = pneg %p81
    $region37: #{tpu_custom_call.1} parent=1 // pred_check_branch
      %87 = sbr.rel (%p85) target = $region39
    $region38: #{tpu_custom_call.1} parent=1 // pred_region
      %s88 = sshllo.u32 0, 1
      loop: start=0, step=1, limit=1
      $region40: #{tpu_custom_call.1} parent=38 // loop_pre_header
        _
      $region41: #{tpu_custom_call.1} parent=38 // loop_header
        %s90 = sphi 0, %s94
        %p91 = scmp.ge.s32.totalorder %s90, 1
        %s95 = sphi %s77, %s77
        %s96 = sphi %s78, %s78
      $region42: #{tpu_custom_call.1} parent=38 // loop_header_branch
        %93 = sbr.rel (%p91) target = $region46
      $region43: #{tpu_custom_call.1} parent=38 // loop_body
        %v97 = vld [vmem:[%s95] sm:%s88]
        %98 = vst [vmem:[%s96] sm:%s88] %v97
        %v99 = vld [vmem:[%s95 + $0x8] sm:%s88]
        %100 = vst [vmem:[%s96 + $0x8] sm:%s88] %v99
        %v101 = vld [vmem:[%s95 + $0x10] sm:%s88]
        %102 = vst [vmem:[%s96 + $0x10] sm:%s88] %v101
      $region44: #{tpu_custom_call.1} parent=38 // loop_footer
        %s94 = sadd.s32 1, %s90
      $region45: #{tpu_custom_call.1} parent=38 // loop_footer_branch
        %89 = sbr.rel target = $region41
      $region46: #{tpu_custom_call.1} parent=38 // loop_exit
        _
    $region39: #{tpu_custom_call.1} parent=1 // pred_fallthru
      _
    // Predicated region
    $region58: #{tpu_custom_call.1} parent=1 // pred_check
      _
    $region59: #{tpu_custom_call.1} parent=1 // pred_check_branch
      %130 = sbr.rel (0) target = $region61
    $region60: #{tpu_custom_call.1} parent=1 // pred_region
      %131 = vsyncadd %s79, 48
    $region61: #{tpu_custom_call.1} parent=1 // pred_fallthru
      _
    %s132 = sld [smem:[#allocation5 + $0x2]]
    %s133 = sshrl.u32 %s132, 3
    %s134 = sand.u32 %s132, 7
    %s135 = smul.u32 %s133, 24
    %s136 = sadd.s32 %s134, %s135
    %s137 = scalar_lea.vmem %s1, %s136
    %s138 = scalar_lea.vmem [#allocation2], 2
    %s139 = scalar_lea.sflag [#allocation3], 2
    %p141 = scmp.lt.u32.totalorder 1, 8
    %p142 = pneg %p141
    // Predicated region
    $region62: #{tpu_custom_call.1} parent=1 // pred_check
      _
    $region63: #{tpu_custom_call.1} parent=1 // pred_check_branch
      %144 = sbr.rel (%p141) target = $region65
    $region64: #{tpu_custom_call.1} parent=1 // pred_region
      %s163 = sand.u32 1, 7
      %p164 = scmp.eq.s32.totalorder %s163, 0
      %p165 = pneg %p164
      // Predicated region
      $region77: #{tpu_custom_call.1} parent=64 // pred_check
        _
      $region78: #{tpu_custom_call.1} parent=64 // pred_check_branch
        %167 = sbr.rel (%p164) target = $region80
      $region79: #{tpu_custom_call.1} parent=64 // pred_region
        %s168 = sand.u32 1, 7
        %s169 = ssub.s32 1, %s168
        %s170 = scalar_lea.vmem %s137, %s169
        %s171 = ssub.s32 1, %s168
        %s172 = scalar_lea.vmem %s138, %s171 [#allocation2]
        %s173 = sshllo.u32 0, %s168
        loop: start=0, step=1, limit=1
        $region81: #{tpu_custom_call.1} parent=79 // loop_pre_header
          _
        $region82: #{tpu_custom_call.1} parent=79 // loop_header
          %s175 = sphi 0, %s179
          %p176 = scmp.ge.s32.totalorder %s175, 1
          %s180 = sphi %s170, %s170
          %s181 = sphi %s172, %s172
        $region83: #{tpu_custom_call.1} parent=79 // loop_header_branch
          %178 = sbr.rel (%p176) target = $region87
        $region84: #{tpu_custom_call.1} parent=79 // loop_body
          %v182 = vld [vmem:[%s180] sm:%s173]
          %183 = vst [vmem:[%s181] sm:%s173] %v182
          %v184 = vld [vmem:[%s180 + $0x8] sm:%s173]
          %185 = vst [vmem:[%s181 + $0x8] sm:%s173] %v184
          %v186 = vld [vmem:[%s180 + $0x10] sm:%s173]
          %187 = vst [vmem:[%s181 + $0x10] sm:%s173] %v186
        $region85: #{tpu_custom_call.1} parent=79 // loop_footer
          %s179 = sadd.s32 1, %s175
        $region86: #{tpu_custom_call.1} parent=79 // loop_footer_branch
          %174 = sbr.rel target = $region82
        $region87: #{tpu_custom_call.1} parent=79 // loop_exit
          _
      $region80: #{tpu_custom_call.1} parent=64 // pred_fallthru
        _
    $region65: #{tpu_custom_call.1} parent=1 // pred_fallthru
      _
    // Predicated region
    $region66: #{tpu_custom_call.1} parent=1 // pred_check
      %p145 = pneg %p141
    $region67: #{tpu_custom_call.1} parent=1 // pred_check_branch
      %147 = sbr.rel (%p145) target = $region69
    $region68: #{tpu_custom_call.1} parent=1 // pred_region
      %s148 = sshllo.u32 0, 1
      loop: start=0, step=1, limit=1
      $region70: #{tpu_custom_call.1} parent=68 // loop_pre_header
        _
      $region71: #{tpu_custom_call.1} parent=68 // loop_header
        %s150 = sphi 0, %s154
        %p151 = scmp.ge.s32.totalorder %s150, 1
        %s155 = sphi %s137, %s137
        %s156 = sphi %s138, %s138
      $region72: #{tpu_custom_call.1} parent=68 // loop_header_branch
        %153 = sbr.rel (%p151) target = $region76
      $region73: #{tpu_custom_call.1} parent=68 // loop_body
        %v157 = vld [vmem:[%s155] sm:%s148]
        %158 = vst [vmem:[%s156] sm:%s148] %v157
        %v159 = vld [vmem:[%s155 + $0x8] sm:%s148]
        %160 = vst [vmem:[%s156 + $0x8] sm:%s148] %v159
        %v161 = vld [vmem:[%s155 + $0x10] sm:%s148]
        %162 = vst [vmem:[%s156 + $0x10] sm:%s148] %v161
      $region74: #{tpu_custom_call.1} parent=68 // loop_footer
        %s154 = sadd.s32 1, %s150
      $region75: #{tpu_custom_call.1} parent=68 // loop_footer_branch
        %149 = sbr.rel target = $region71
      $region76: #{tpu_custom_call.1} parent=68 // loop_exit
        _
    $region69: #{tpu_custom_call.1} parent=1 // pred_fallthru
      _
    // Predicated region
    $region88: #{tpu_custom_call.1} parent=1 // pred_check
      _
    $region89: #{tpu_custom_call.1} parent=1 // pred_check_branch
      %190 = sbr.rel (0) target = $region91
    $region90: #{tpu_custom_call.1} parent=1 // pred_region
      %191 = vsyncadd %s139, 48
    $region91: #{tpu_custom_call.1} parent=1 // pred_fallthru
      _
    %s192 = sld [smem:[#allocation5 + $0x3]]
    %s193 = sshrl.u32 %s192, 3
    %s194 = sand.u32 %s192, 7
    %s195 = smul.u32 %s193, 24
    %s196 = sadd.s32 %s194, %s195
    %s197 = scalar_lea.vmem %s1, %s196
    %s198 = scalar_lea.vmem [#allocation2], 3
    %s199 = scalar_lea.sflag [#allocation3], 3
    %p201 = scmp.lt.u32.totalorder 1, 8
    %p202 = pneg %p201
    // Predicated region
    $region92: #{tpu_custom_call.1} parent=1 // pred_check
      _
    $region93: #{tpu_custom_call.1} parent=1 // pred_check_branch
      %204 = sbr.rel (%p201) target = $region95
    $region94: #{tpu_custom_call.1} parent=1 // pred_region
      %s223 = sand.u32 1, 7
      %p224 = scmp.eq.s32.totalorder %s223, 0
      %p225 = pneg %p224
      // Predicated region
      $region107: #{tpu_custom_call.1} parent=94 // pred_check
        _
      $region108: #{tpu_custom_call.1} parent=94 // pred_check_branch
        %227 = sbr.rel (%p224) target = $region110
      $region109: #{tpu_custom_call.1} parent=94 // pred_region
        %s228 = sand.u32 1, 7
        %s229 = ssub.s32 1, %s228
        %s230 = scalar_lea.vmem %s197, %s229
        %s231 = ssub.s32 1, %s228
        %s232 = scalar_lea.vmem %s198, %s231 [#allocation2]
        %s233 = sshllo.u32 0, %s228
        loop: start=0, step=1, limit=1
        $region111: #{tpu_custom_call.1} parent=109 // loop_pre_header
          _
        $region112: #{tpu_custom_call.1} parent=109 // loop_header
          %s235 = sphi 0, %s239
          %p236 = scmp.ge.s32.totalorder %s235, 1
          %s240 = sphi %s230, %s230
          %s241 = sphi %s232, %s232
        $region113: #{tpu_custom_call.1} parent=109 // loop_header_branch
          %238 = sbr.rel (%p236) target = $region117
        $region114: #{tpu_custom_call.1} parent=109 // loop_body
          %v242 = vld [vmem:[%s240] sm:%s233]
          %243 = vst [vmem:[%s241] sm:%s233] %v242
          %v244 = vld [vmem:[%s240 + $0x8] sm:%s233]
          %245 = vst [vmem:[%s241 + $0x8] sm:%s233] %v244
          %v246 = vld [vmem:[%s240 + $0x10] sm:%s233]
          %247 = vst [vmem:[%s241 + $0x10] sm:%s233] %v246
        $region115: #{tpu_custom_call.1} parent=109 // loop_footer
          %s239 = sadd.s32 1, %s235
        $region116: #{tpu_custom_call.1} parent=109 // loop_footer_branch
          %234 = sbr.rel target = $region112
        $region117: #{tpu_custom_call.1} parent=109 // loop_exit
          _
      $region110: #{tpu_custom_call.1} parent=94 // pred_fallthru
        _
    $region95: #{tpu_custom_call.1} parent=1 // pred_fallthru
      _
    // Predicated region
    $region96: #{tpu_custom_call.1} parent=1 // pred_check
      %p205 = pneg %p201
    $region97: #{tpu_custom_call.1} parent=1 // pred_check_branch
      %207 = sbr.rel (%p205) target = $region99
    $region98: #{tpu_custom_call.1} parent=1 // pred_region
      %s208 = sshllo.u32 0, 1
      loop: start=0, step=1, limit=1
      $region100: #{tpu_custom_call.1} parent=98 // loop_pre_header
        _
      $region101: #{tpu_custom_call.1} parent=98 // loop_header
        %s210 = sphi 0, %s214
        %p211 = scmp.ge.s32.totalorder %s210, 1
        %s215 = sphi %s197, %s197
        %s216 = sphi %s198, %s198
      $region102: #{tpu_custom_call.1} parent=98 // loop_header_branch
        %213 = sbr.rel (%p211) target = $region106
      $region103: #{tpu_custom_call.1} parent=98 // loop_body
        %v217 = vld [vmem:[%s215] sm:%s208]
        %218 = vst [vmem:[%s216] sm:%s208] %v217
        %v219 = vld [vmem:[%s215 + $0x8] sm:%s208]
        %220 = vst [vmem:[%s216 + $0x8] sm:%s208] %v219
        %v221 = vld [vmem:[%s215 + $0x10] sm:%s208]
        %222 = vst [vmem:[%s216 + $0x10] sm:%s208] %v221
      $region104: #{tpu_custom_call.1} parent=98 // loop_footer
        %s214 = sadd.s32 1, %s210
      $region105: #{tpu_custom_call.1} parent=98 // loop_footer_branch
        %209 = sbr.rel target = $region101
      $region106: #{tpu_custom_call.1} parent=98 // loop_exit
        _
    $region99: #{tpu_custom_call.1} parent=1 // pred_fallthru
      _
    // Predicated region
    $region118: #{tpu_custom_call.1} parent=1 // pred_check
      _
    $region119: #{tpu_custom_call.1} parent=1 // pred_check_branch
      %250 = sbr.rel (0) target = $region121
    $region120: #{tpu_custom_call.1} parent=1 // pred_region
      %251 = vsyncadd %s199, 48
    $region121: #{tpu_custom_call.1} parent=1 // pred_fallthru
      _
    %s252 = sld [smem:[#allocation5 + $0x4]]
    %s253 = sshrl.u32 %s252, 3
    %s254 = sand.u32 %s252, 7
    %s255 = smul.u32 %s253, 24
    %s256 = sadd.s32 %s254, %s255
    %s257 = scalar_lea.vmem %s1, %s256
    %s258 = scalar_lea.vmem [#allocation2], 4
    %s259 = scalar_lea.sflag [#allocation3], 4
    %p261 = scmp.lt.u32.totalorder 1, 8
    %p262 = pneg %p261
    // Predicated region
    $region122: #{tpu_custom_call.1} parent=1 // pred_check
      _
    $region123: #{tpu_custom_call.1} parent=1 // pred_check_branch
      %264 = sbr.rel (%p261) target = $region125
    $region124: #{tpu_custom_call.1} parent=1 // pred_region
      %s283 = sand.u32 1, 7
      %p284 = scmp.eq.s32.totalorder %s283, 0
      %p285 = pneg %p284
      // Predicated region
      $region137: #{tpu_custom_call.1} parent=124 // pred_check
        _
      $region138: #{tpu_custom_call.1} parent=124 // pred_check_branch
        %287 = sbr.rel (%p284) target = $region140
      $region139: #{tpu_custom_call.1} parent=124 // pred_region
        %s288 = sand.u32 1, 7
        %s289 = ssub.s32 1, %s288
        %s290 = scalar_lea.vmem %s257, %s289
        %s291 = ssub.s32 1, %s288
        %s292 = scalar_lea.vmem %s258, %s291 [#allocation2]
        %s293 = sshllo.u32 0, %s288
        loop: start=0, step=1, limit=1
        $region141: #{tpu_custom_call.1} parent=139 // loop_pre_header
          _
        $region142: #{tpu_custom_call.1} parent=139 // loop_header
          %s295 = sphi 0, %s299
          %p296 = scmp.ge.s32.totalorder %s295, 1
          %s300 = sphi %s290, %s290
          %s301 = sphi %s292, %s292
        $region143: #{tpu_custom_call.1} parent=139 // loop_header_branch
          %298 = sbr.rel (%p296) target = $region147
        $region144: #{tpu_custom_call.1} parent=139 // loop_body
          %v302 = vld [vmem:[%s300] sm:%s293]
          %303 = vst [vmem:[%s301] sm:%s293] %v302
          %v304 = vld [vmem:[%s300 + $0x8] sm:%s293]
          %305 = vst [vmem:[%s301 + $0x8] sm:%s293] %v304
          %v306 = vld [vmem:[%s300 + $0x10] sm:%s293]
          %307 = vst [vmem:[%s301 + $0x10] sm:%s293] %v306
        $region145: #{tpu_custom_call.1} parent=139 // loop_footer
          %s299 = sadd.s32 1, %s295
        $region146: #{tpu_custom_call.1} parent=139 // loop_footer_branch
          %294 = sbr.rel target = $region142
        $region147: #{tpu_custom_call.1} parent=139 // loop_exit
          _
      $region140: #{tpu_custom_call.1} parent=124 // pred_fallthru
        _
    $region125: #{tpu_custom_call.1} parent=1 // pred_fallthru
      _
    // Predicated region
    $region126: #{tpu_custom_call.1} parent=1 // pred_check
      %p265 = pneg %p261
    $region127: #{tpu_custom_call.1} parent=1 // pred_check_branch
      %267 = sbr.rel (%p265) target = $region129
    $region128: #{tpu_custom_call.1} parent=1 // pred_region
      %s268 = sshllo.u32 0, 1
      loop: start=0, step=1, limit=1
      $region130: #{tpu_custom_call.1} parent=128 // loop_pre_header
        _
      $region131: #{tpu_custom_call.1} parent=128 // loop_header
        %s270 = sphi 0, %s274
        %p271 = scmp.ge.s32.totalorder %s270, 1
        %s275 = sphi %s257, %s257
        %s276 = sphi %s258, %s258
      $region132: #{tpu_custom_call.1} parent=128 // loop_header_branch
        %273 = sbr.rel (%p271) target = $region136
      $region133: #{tpu_custom_call.1} parent=128 // loop_body
        %v277 = vld [vmem:[%s275] sm:%s268]
        %278 = vst [vmem:[%s276] sm:%s268] %v277
        %v279 = vld [vmem:[%s275 + $0x8] sm:%s268]
        %280 = vst [vmem:[%s276 + $0x8] sm:%s268] %v279
        %v281 = vld [vmem:[%s275 + $0x10] sm:%s268]
        %282 = vst [vmem:[%s276 + $0x10] sm:%s268] %v281
      $region134: #{tpu_custom_call.1} parent=128 // loop_footer
        %s274 = sadd.s32 1, %s270
      $region135: #{tpu_custom_call.1} parent=128 // loop_footer_branch
        %269 = sbr.rel target = $region131
      $region136: #{tpu_custom_call.1} parent=128 // loop_exit
        _
    $region129: #{tpu_custom_call.1} parent=1 // pred_fallthru
      _
    // Predicated region
    $region148: #{tpu_custom_call.1} parent=1 // pred_check
      _
    $region149: #{tpu_custom_call.1} parent=1 // pred_check_branch
      %310 = sbr.rel (0) target = $region151
    $region150: #{tpu_custom_call.1} parent=1 // pred_region
      %311 = vsyncadd %s259, 48
    $region151: #{tpu_custom_call.1} parent=1 // pred_fallthru
      _
    %s312 = sld [smem:[#allocation5 + $0x5]]
    %s313 = sshrl.u32 %s312, 3
    %s314 = sand.u32 %s312, 7
    %s315 = smul.u32 %s313, 24
    %s316 = sadd.s32 %s314, %s315
    %s317 = scalar_lea.vmem %s1, %s316
    %s318 = scalar_lea.vmem [#allocation2], 5
    %s319 = scalar_lea.sflag [#allocation3], 5
    %p321 = scmp.lt.u32.totalorder 1, 8
    %p322 = pneg %p321
    // Predicated region
    $region152: #{tpu_custom_call.1} parent=1 // pred_check
      _
    $region153: #{tpu_custom_call.1} parent=1 // pred_check_branch
      %324 = sbr.rel (%p321) target = $region155
    $region154: #{tpu_custom_call.1} parent=1 // pred_region
      %s343 = sand.u32 1, 7
      %p344 = scmp.eq.s32.totalorder %s343, 0
      %p345 = pneg %p344
      // Predicated region
      $region167: #{tpu_custom_call.1} parent=154 // pred_check
        _
      $region168: #{tpu_custom_call.1} parent=154 // pred_check_branch
        %347 = sbr.rel (%p344) target = $region170
      $region169: #{tpu_custom_call.1} parent=154 // pred_region
        %s348 = sand.u32 1, 7
        %s349 = ssub.s32 1, %s348
        %s350 = scalar_lea.vmem %s317, %s349
        %s351 = ssub.s32 1, %s348
        %s352 = scalar_lea.vmem %s318, %s351 [#allocation2]
        %s353 = sshllo.u32 0, %s348
        loop: start=0, step=1, limit=1
        $region171: #{tpu_custom_call.1} parent=169 // loop_pre_header
          _
        $region172: #{tpu_custom_call.1} parent=169 // loop_header
          %s355 = sphi 0, %s359
          %p356 = scmp.ge.s32.totalorder %s355, 1
          %s360 = sphi %s350, %s350
          %s361 = sphi %s352, %s352
        $region173: #{tpu_custom_call.1} parent=169 // loop_header_branch
          %358 = sbr.rel (%p356) target = $region177
        $region174: #{tpu_custom_call.1} parent=169 // loop_body
          %v362 = vld [vmem:[%s360] sm:%s353]
          %363 = vst [vmem:[%s361] sm:%s353] %v362
          %v364 = vld [vmem:[%s360 + $0x8] sm:%s353]
          %365 = vst [vmem:[%s361 + $0x8] sm:%s353] %v364
          %v366 = vld [vmem:[%s360 + $0x10] sm:%s353]
          %367 = vst [vmem:[%s361 + $0x10] sm:%s353] %v366
        $region175: #{tpu_custom_call.1} parent=169 // loop_footer
          %s359 = sadd.s32 1, %s355
        $region176: #{tpu_custom_call.1} parent=169 // loop_footer_branch
          %354 = sbr.rel target = $region172
        $region177: #{tpu_custom_call.1} parent=169 // loop_exit
          _
      $region170: #{tpu_custom_call.1} parent=154 // pred_fallthru
        _
    $region155: #{tpu_custom_call.1} parent=1 // pred_fallthru
      _
    // Predicated region
    $region156: #{tpu_custom_call.1} parent=1 // pred_check
      %p325 = pneg %p321
    $region157: #{tpu_custom_call.1} parent=1 // pred_check_branch
      %327 = sbr.rel (%p325) target = $region159
    $region158: #{tpu_custom_call.1} parent=1 // pred_region
      %s328 = sshllo.u32 0, 1
      loop: start=0, step=1, limit=1
      $region160: #{tpu_custom_call.1} parent=158 // loop_pre_header
        _
      $region161: #{tpu_custom_call.1} parent=158 // loop_header
        %s330 = sphi 0, %s334
        %p331 = scmp.ge.s32.totalorder %s330, 1
        %s335 = sphi %s317, %s317
        %s336 = sphi %s318, %s318
      $region162: #{tpu_custom_call.1} parent=158 // loop_header_branch
        %333 = sbr.rel (%p331) target = $region166
      $region163: #{tpu_custom_call.1} parent=158 // loop_body
        %v337 = vld [vmem:[%s335] sm:%s328]
        %338 = vst [vmem:[%s336] sm:%s328] %v337
        %v339 = vld [vmem:[%s335 + $0x8] sm:%s328]
        %340 = vst [vmem:[%s336 + $0x8] sm:%s328] %v339
        %v341 = vld [vmem:[%s335 + $0x10] sm:%s328]
        %342 = vst [vmem:[%s336 + $0x10] sm:%s328] %v341
      $region164: #{tpu_custom_call.1} parent=158 // loop_footer
        %s334 = sadd.s32 1, %s330
      $region165: #{tpu_custom_call.1} parent=158 // loop_footer_branch
        %329 = sbr.rel target = $region161
      $region166: #{tpu_custom_call.1} parent=158 // loop_exit
        _
    $region159: #{tpu_custom_call.1} parent=1 // pred_fallthru
      _
    // Predicated region
    $region178: #{tpu_custom_call.1} parent=1 // pred_check
      _
    $region179: #{tpu_custom_call.1} parent=1 // pred_check_branch
      %370 = sbr.rel (0) target = $region181
    $region180: #{tpu_custom_call.1} parent=1 // pred_region
      %371 = vsyncadd %s319, 48
    $region181: #{tpu_custom_call.1} parent=1 // pred_fallthru
      _
    %s372 = sld [smem:[#allocation5 + $0x6]]
    %s373 = sshrl.u32 %s372, 3
    %s374 = sand.u32 %s372, 7
    %s375 = smul.u32 %s373, 24
    %s376 = sadd.s32 %s374, %s375
    %s377 = scalar_lea.vmem %s1, %s376
    %s378 = scalar_lea.vmem [#allocation2], 6
    %s379 = scalar_lea.sflag [#allocation3], 6
    %p381 = scmp.lt.u32.totalorder 1, 8
    %p382 = pneg %p381
    // Predicated region
    $region182: #{tpu_custom_call.1} parent=1 // pred_check
      _
    $region183: #{tpu_custom_call.1} parent=1 // pred_check_branch
      %384 = sbr.rel (%p381) target = $region185
    $region184: #{tpu_custom_call.1} parent=1 // pred_region
      %s403 = sand.u32 1, 7
      %p404 = scmp.eq.s32.totalorder %s403, 0
      %p405 = pneg %p404
      // Predicated region
      $region197: #{tpu_custom_call.1} parent=184 // pred_check
        _
      $region198: #{tpu_custom_call.1} parent=184 // pred_check_branch
        %407 = sbr.rel (%p404) target = $region200
      $region199: #{tpu_custom_call.1} parent=184 // pred_region
        %s408 = sand.u32 1, 7
        %s409 = ssub.s32 1, %s408
        %s410 = scalar_lea.vmem %s377, %s409
        %s411 = ssub.s32 1, %s408
        %s412 = scalar_lea.vmem %s378, %s411 [#allocation2]
        %s413 = sshllo.u32 0, %s408
        loop: start=0, step=1, limit=1
        $region201: #{tpu_custom_call.1} parent=199 // loop_pre_header
          _
        $region202: #{tpu_custom_call.1} parent=199 // loop_header
          %s415 = sphi 0, %s419
          %p416 = scmp.ge.s32.totalorder %s415, 1
          %s420 = sphi %s410, %s410
          %s421 = sphi %s412, %s412
        $region203: #{tpu_custom_call.1} parent=199 // loop_header_branch
          %418 = sbr.rel (%p416) target = $region207
        $region204: #{tpu_custom_call.1} parent=199 // loop_body
          %v422 = vld [vmem:[%s420] sm:%s413]
          %423 = vst [vmem:[%s421] sm:%s413] %v422
          %v424 = vld [vmem:[%s420 + $0x8] sm:%s413]
          %425 = vst [vmem:[%s421 + $0x8] sm:%s413] %v424
          %v426 = vld [vmem:[%s420 + $0x10] sm:%s413]
          %427 = vst [vmem:[%s421 + $0x10] sm:%s413] %v426
        $region205: #{tpu_custom_call.1} parent=199 // loop_footer
          %s419 = sadd.s32 1, %s415
        $region206: #{tpu_custom_call.1} parent=199 // loop_footer_branch
          %414 = sbr.rel target = $region202
        $region207: #{tpu_custom_call.1} parent=199 // loop_exit
          _
      $region200: #{tpu_custom_call.1} parent=184 // pred_fallthru
        _
    $region185: #{tpu_custom_call.1} parent=1 // pred_fallthru
      _
    // Predicated region
    $region186: #{tpu_custom_call.1} parent=1 // pred_check
      %p385 = pneg %p381
    $region187: #{tpu_custom_call.1} parent=1 // pred_check_branch
      %387 = sbr.rel (%p385) target = $region189
    $region188: #{tpu_custom_call.1} parent=1 // pred_region
      %s388 = sshllo.u32 0, 1
      loop: start=0, step=1, limit=1
      $region190: #{tpu_custom_call.1} parent=188 // loop_pre_header
        _
      $region191: #{tpu_custom_call.1} parent=188 // loop_header
        %s390 = sphi 0, %s394
        %p391 = scmp.ge.s32.totalorder %s390, 1
        %s395 = sphi %s377, %s377
        %s396 = sphi %s378, %s378
      $region192: #{tpu_custom_call.1} parent=188 // loop_header_branch
        %393 = sbr.rel (%p391) target = $region196
      $region193: #{tpu_custom_call.1} parent=188 // loop_body
        %v397 = vld [vmem:[%s395] sm:%s388]
        %398 = vst [vmem:[%s396] sm:%s388] %v397
        %v399 = vld [vmem:[%s395 + $0x8] sm:%s388]
        %400 = vst [vmem:[%s396 + $0x8] sm:%s388] %v399
        %v401 = vld [vmem:[%s395 + $0x10] sm:%s388]
        %402 = vst [vmem:[%s396 + $0x10] sm:%s388] %v401
      $region194: #{tpu_custom_call.1} parent=188 // loop_footer
        %s394 = sadd.s32 1, %s390
      $region195: #{tpu_custom_call.1} parent=188 // loop_footer_branch
        %389 = sbr.rel target = $region191
      $region196: #{tpu_custom_call.1} parent=188 // loop_exit
        _
    $region189: #{tpu_custom_call.1} parent=1 // pred_fallthru
      _
    // Predicated region
    $region208: #{tpu_custom_call.1} parent=1 // pred_check
      _
    $region209: #{tpu_custom_call.1} parent=1 // pred_check_branch
      %430 = sbr.rel (0) target = $region211
    $region210: #{tpu_custom_call.1} parent=1 // pred_region
      %431 = vsyncadd %s379, 48
    $region211: #{tpu_custom_call.1} parent=1 // pred_fallthru
      _
    %s432 = sld [smem:[#allocation5 + $0x7]]
    %s433 = sshrl.u32 %s432, 3
    %s434 = sand.u32 %s432, 7
    %s435 = smul.u32 %s433, 24
    %s436 = sadd.s32 %s434, %s435
    %s437 = scalar_lea.vmem %s1, %s436
    %s438 = scalar_lea.vmem [#allocation2], 7
    %s439 = scalar_lea.sflag [#allocation3], 7
    %p441 = scmp.lt.u32.totalorder 1, 8
    %p442 = pneg %p441
    // Predicated region
    $region212: #{tpu_custom_call.1} parent=1 // pred_check
      _
    $region213: #{tpu_custom_call.1} parent=1 // pred_check_branch
      %444 = sbr.rel (%p441) target = $region215
    $region214: #{tpu_custom_call.1} parent=1 // pred_region
      %s463 = sand.u32 1, 7
      %p464 = scmp.eq.s32.totalorder %s463, 0
      %p465 = pneg %p464
      // Predicated region
      $region227: #{tpu_custom_call.1} parent=214 // pred_check
        _
      $region228: #{tpu_custom_call.1} parent=214 // pred_check_branch
        %467 = sbr.rel (%p464) target = $region230
      $region229: #{tpu_custom_call.1} parent=214 // pred_region
        %s468 = sand.u32 1, 7
        %s469 = ssub.s32 1, %s468
        %s470 = scalar_lea.vmem %s437, %s469
        %s471 = ssub.s32 1, %s468
        %s472 = scalar_lea.vmem %s438, %s471 [#allocation2]
        %s473 = sshllo.u32 0, %s468
        loop: start=0, step=1, limit=1
        $region231: #{tpu_custom_call.1} parent=229 // loop_pre_header
          _
        $region232: #{tpu_custom_call.1} parent=229 // loop_header
          %s475 = sphi 0, %s479
          %p476 = scmp.ge.s32.totalorder %s475, 1
          %s480 = sphi %s470, %s470
          %s481 = sphi %s472, %s472
        $region233: #{tpu_custom_call.1} parent=229 // loop_header_branch
          %478 = sbr.rel (%p476) target = $region237
        $region234: #{tpu_custom_call.1} parent=229 // loop_body
          %v482 = vld [vmem:[%s480] sm:%s473]
          %483 = vst [vmem:[%s481] sm:%s473] %v482
          %v484 = vld [vmem:[%s480 + $0x8] sm:%s473]
          %485 = vst [vmem:[%s481 + $0x8] sm:%s473] %v484
          %v486 = vld [vmem:[%s480 + $0x10] sm:%s473]
          %487 = vst [vmem:[%s481 + $0x10] sm:%s473] %v486
        $region235: #{tpu_custom_call.1} parent=229 // loop_footer
          %s479 = sadd.s32 1, %s475
        $region236: #{tpu_custom_call.1} parent=229 // loop_footer_branch
          %474 = sbr.rel target = $region232
        $region237: #{tpu_custom_call.1} parent=229 // loop_exit
          _
      $region230: #{tpu_custom_call.1} parent=214 // pred_fallthru
        _
    $region215: #{tpu_custom_call.1} parent=1 // pred_fallthru
      _
    // Predicated region
    $region216: #{tpu_custom_call.1} parent=1 // pred_check
      %p445 = pneg %p441
    $region217: #{tpu_custom_call.1} parent=1 // pred_check_branch
      %447 = sbr.rel (%p445) target = $region219
    $region218: #{tpu_custom_call.1} parent=1 // pred_region
      %s448 = sshllo.u32 0, 1
      loop: start=0, step=1, limit=1
      $region220: #{tpu_custom_call.1} parent=218 // loop_pre_header
        _
      $region221: #{tpu_custom_call.1} parent=218 // loop_header
        %s450 = sphi 0, %s454
        %p451 = scmp.ge.s32.totalorder %s450, 1
        %s455 = sphi %s437, %s437
        %s456 = sphi %s438, %s438
      $region222: #{tpu_custom_call.1} parent=218 // loop_header_branch
        %453 = sbr.rel (%p451) target = $region226
      $region223: #{tpu_custom_call.1} parent=218 // loop_body
        %v457 = vld [vmem:[%s455] sm:%s448]
        %458 = vst [vmem:[%s456] sm:%s448] %v457
        %v459 = vld [vmem:[%s455 + $0x8] sm:%s448]
        %460 = vst [vmem:[%s456 + $0x8] sm:%s448] %v459
        %v461 = vld [vmem:[%s455 + $0x10] sm:%s448]
        %462 = vst [vmem:[%s456 + $0x10] sm:%s448] %v461
      $region224: #{tpu_custom_call.1} parent=218 // loop_footer
        %s454 = sadd.s32 1, %s450
      $region225: #{tpu_custom_call.1} parent=218 // loop_footer_branch
        %449 = sbr.rel target = $region221
      $region226: #{tpu_custom_call.1} parent=218 // loop_exit
        _
    $region219: #{tpu_custom_call.1} parent=1 // pred_fallthru
      _
    // Predicated region
    $region238: #{tpu_custom_call.1} parent=1 // pred_check
      _
    $region239: #{tpu_custom_call.1} parent=1 // pred_check_branch
      %490 = sbr.rel (0) target = $region241
    $region240: #{tpu_custom_call.1} parent=1 // pred_region
      %491 = vsyncadd %s439, 48
    $region241: #{tpu_custom_call.1} parent=1 // pred_fallthru
      _
    %s492 = sld [smem:[#allocation5]]
    %s493 = sshrl.u32 %s492, 3
    %s494 = sand.u32 %s492, 7
    %s495 = smul.u32 %s493, 24
    %s496 = sadd.s32 %s494, %s495
    %s497 = scalar_lea.vmem %s1, %s496
    %s498 = scalar_lea.vmem [#allocation2], 24
    %s499 = scalar_lea.sflag [#allocation3], 8
    %p501 = scmp.lt.u32.totalorder 1, 8
    %p502 = pneg %p501
    // Predicated region
    $region242: #{tpu_custom_call.1} parent=1 // pred_check
      _
    $region243: #{tpu_custom_call.1} parent=1 // pred_check_branch
      %504 = sbr.rel (%p501) target = $region245
    $region244: #{tpu_custom_call.1} parent=1 // pred_region
      %s523 = sand.u32 1, 7
      %p524 = scmp.eq.s32.totalorder %s523, 0
      %p525 = pneg %p524
      // Predicated region
      $region257: #{tpu_custom_call.1} parent=244 // pred_check
        _
      $region258: #{tpu_custom_call.1} parent=244 // pred_check_branch
        %527 = sbr.rel (%p524) target = $region260
      $region259: #{tpu_custom_call.1} parent=244 // pred_region
        %s528 = sand.u32 1, 7
        %s529 = ssub.s32 1, %s528
        %s530 = scalar_lea.vmem %s497, %s529
        %s531 = ssub.s32 1, %s528
        %s532 = scalar_lea.vmem %s498, %s531 [#allocation2]
        %s533 = sshllo.u32 0, %s528
        loop: start=0, step=1, limit=1
        $region261: #{tpu_custom_call.1} parent=259 // loop_pre_header
          _
        $region262: #{tpu_custom_call.1} parent=259 // loop_header
          %s535 = sphi 0, %s539
          %p536 = scmp.ge.s32.totalorder %s535, 1
          %s540 = sphi %s530, %s530
          %s541 = sphi %s532, %s532
        $region263: #{tpu_custom_call.1} parent=259 // loop_header_branch
          %538 = sbr.rel (%p536) target = $region267
        $region264: #{tpu_custom_call.1} parent=259 // loop_body
          %v542 = vld [vmem:[%s540] sm:%s533]
          %543 = vst [vmem:[%s541] sm:%s533] %v542
          %v544 = vld [vmem:[%s540 + $0x8] sm:%s533]
          %545 = vst [vmem:[%s541 + $0x8] sm:%s533] %v544
          %v546 = vld [vmem:[%s540 + $0x10] sm:%s533]
          %547 = vst [vmem:[%s541 + $0x10] sm:%s533] %v546
        $region265: #{tpu_custom_call.1} parent=259 // loop_footer
          %s539 = sadd.s32 1, %s535
        $region266: #{tpu_custom_call.1} parent=259 // loop_footer_branch
          %534 = sbr.rel target = $region262
        $region267: #{tpu_custom_call.1} parent=259 // loop_exit
          _
      $region260: #{tpu_custom_call.1} parent=244 // pred_fallthru
        _
    $region245: #{tpu_custom_call.1} parent=1 // pred_fallthru
      _
    // Predicated region
    $region246: #{tpu_custom_call.1} parent=1 // pred_check
      %p505 = pneg %p501
    $region247: #{tpu_custom_call.1} parent=1 // pred_check_branch
      %507 = sbr.rel (%p505) target = $region249
    $region248: #{tpu_custom_call.1} parent=1 // pred_region
      %s508 = sshllo.u32 0, 1
      loop: start=0, step=1, limit=1
      $region250: #{tpu_custom_call.1} parent=248 // loop_pre_header
        _
      $region251: #{tpu_custom_call.1} parent=248 // loop_header
        %s510 = sphi 0, %s514
        %p511 = scmp.ge.s32.totalorder %s510, 1
        %s515 = sphi %s497, %s497
        %s516 = sphi %s498, %s498
      $region252: #{tpu_custom_call.1} parent=248 // loop_header_branch
        %513 = sbr.rel (%p511) target = $region256
      $region253: #{tpu_custom_call.1} parent=248 // loop_body
        %v517 = vld [vmem:[%s515] sm:%s508]
        %518 = vst [vmem:[%s516] sm:%s508] %v517
        %v519 = vld [vmem:[%s515 + $0x8] sm:%s508]
        %520 = vst [vmem:[%s516 + $0x8] sm:%s508] %v519
        %v521 = vld [vmem:[%s515 + $0x10] sm:%s508]
        %522 = vst [vmem:[%s516 + $0x10] sm:%s508] %v521
      $region254: #{tpu_custom_call.1} parent=248 // loop_footer
        %s514 = sadd.s32 1, %s510
      $region255: #{tpu_custom_call.1} parent=248 // loop_footer_branch
        %509 = sbr.rel target = $region251
      $region256: #{tpu_custom_call.1} parent=248 // loop_exit
        _
    $region249: #{tpu_custom_call.1} parent=1 // pred_fallthru
      _
    // Predicated region
    $region268: #{tpu_custom_call.1} parent=1 // pred_check
      _
    $region269: #{tpu_custom_call.1} parent=1 // pred_check_branch
      %550 = sbr.rel (0) target = $region271
    $region270: #{tpu_custom_call.1} parent=1 // pred_region
      %551 = vsyncadd %s499, 48
    $region271: #{tpu_custom_call.1} parent=1 // pred_fallthru
      _
    %s552 = sld [smem:[#allocation5]]
    %s553 = sshrl.u32 %s552, 3
    %s554 = sand.u32 %s552, 7
    %s555 = smul.u32 %s553, 24
    %s556 = sadd.s32 %s554, %s555
    %s557 = scalar_lea.vmem %s1, %s556
    %s558 = scalar_lea.vmem [#allocation2], 25
    %s559 = scalar_lea.sflag [#allocation3], 9
    %p561 = scmp.lt.u32.totalorder 1, 8
    %p562 = pneg %p561
    // Predicated region
    $region272: #{tpu_custom_call.1} parent=1 // pred_check
      _
    $region273: #{tpu_custom_call.1} parent=1 // pred_check_branch
      %564 = sbr.rel (%p561) target = $region275
    $region274: #{tpu_custom_call.1} parent=1 // pred_region
      %s583 = sand.u32 1, 7
      %p584 = scmp.eq.s32.totalorder %s583, 0
      %p585 = pneg %p584
      // Predicated region
      $region287: #{tpu_custom_call.1} parent=274 // pred_check
        _
      $region288: #{tpu_custom_call.1} parent=274 // pred_check_branch
        %587 = sbr.rel (%p584) target = $region290
      $region289: #{tpu_custom_call.1} parent=274 // pred_region
        %s588 = sand.u32 1, 7
        %s589 = ssub.s32 1, %s588
        %s590 = scalar_lea.vmem %s557, %s589
        %s591 = ssub.s32 1, %s588
        %s592 = scalar_lea.vmem %s558, %s591 [#allocation2]
        %s593 = sshllo.u32 0, %s588
        loop: start=0, step=1, limit=1
        $region291: #{tpu_custom_call.1} parent=289 // loop_pre_header
          _
        $region292: #{tpu_custom_call.1} parent=289 // loop_header
          %s595 = sphi 0, %s599
          %p596 = scmp.ge.s32.totalorder %s595, 1
          %s600 = sphi %s590, %s590
          %s601 = sphi %s592, %s592
        $region293: #{tpu_custom_call.1} parent=289 // loop_header_branch
          %598 = sbr.rel (%p596) target = $region297
        $region294: #{tpu_custom_call.1} parent=289 // loop_body
          %v602 = vld [vmem:[%s600] sm:%s593]
          %603 = vst [vmem:[%s601] sm:%s593] %v602
          %v604 = vld [vmem:[%s600 + $0x8] sm:%s593]
          %605 = vst [vmem:[%s601 + $0x8] sm:%s593] %v604
          %v606 = vld [vmem:[%s600 + $0x10] sm:%s593]
          %607 = vst [vmem:[%s601 + $0x10] sm:%s593] %v606
        $region295: #{tpu_custom_call.1} parent=289 // loop_footer
          %s599 = sadd.s32 1, %s595
        $region296: #{tpu_custom_call.1} parent=289 // loop_footer_branch
          %594 = sbr.rel target = $region292
        $region297: #{tpu_custom_call.1} parent=289 // loop_exit
          _
      $region290: #{tpu_custom_call.1} parent=274 // pred_fallthru
        _
    $region275: #{tpu_custom_call.1} parent=1 // pred_fallthru
      _
    // Predicated region
    $region276: #{tpu_custom_call.1} parent=1 // pred_check
      %p565 = pneg %p561
    $region277: #{tpu_custom_call.1} parent=1 // pred_check_branch
      %567 = sbr.rel (%p565) target = $region279
    $region278: #{tpu_custom_call.1} parent=1 // pred_region
      %s568 = sshllo.u32 0, 1
      loop: start=0, step=1, limit=1
      $region280: #{tpu_custom_call.1} parent=278 // loop_pre_header
        _
      $region281: #{tpu_custom_call.1} parent=278 // loop_header
        %s570 = sphi 0, %s574
        %p571 = scmp.ge.s32.totalorder %s570, 1
        %s575 = sphi %s557, %s557
        %s576 = sphi %s558, %s558
      $region282: #{tpu_custom_call.1} parent=278 // loop_header_branch
        %573 = sbr.rel (%p571) target = $region286
      $region283: #{tpu_custom_call.1} parent=278 // loop_body
        %v577 = vld [vmem:[%s575] sm:%s568]
        %578 = vst [vmem:[%s576] sm:%s568] %v577
        %v579 = vld [vmem:[%s575 + $0x8] sm:%s568]
        %580 = vst [vmem:[%s576 + $0x8] sm:%s568] %v579
        %v581 = vld [vmem:[%s575 + $0x10] sm:%s568]
        %582 = vst [vmem:[%s576 + $0x10] sm:%s568] %v581
      $region284: #{tpu_custom_call.1} parent=278 // loop_footer
        %s574 = sadd.s32 1, %s570
      $region285: #{tpu_custom_call.1} parent=278 // loop_footer_branch
        %569 = sbr.rel target = $region281
      $region286: #{tpu_custom_call.1} parent=278 // loop_exit
        _
    $region279: #{tpu_custom_call.1} parent=1 // pred_fallthru
      _
    // Predicated region
    $region298: #{tpu_custom_call.1} parent=1 // pred_check
      _
    $region299: #{tpu_custom_call.1} parent=1 // pred_check_branch
      %610 = sbr.rel (0) target = $region301
    $region300: #{tpu_custom_call.1} parent=1 // pred_region
      %611 = vsyncadd %s559, 48
    $region301: #{tpu_custom_call.1} parent=1 // pred_fallthru
      _
    %s612 = sld [smem:[#allocation5]]
    %s613 = sshrl.u32 %s612, 3
    %s614 = sand.u32 %s612, 7
    %s615 = smul.u32 %s613, 24
    %s616 = sadd.s32 %s614, %s615
    %s617 = scalar_lea.vmem %s1, %s616
    %s618 = scalar_lea.vmem [#allocation2], 26
    %s619 = scalar_lea.sflag [#allocation3], 10
    %p621 = scmp.lt.u32.totalorder 1, 8
    %p622 = pneg %p621
    // Predicated region
    $region302: #{tpu_custom_call.1} parent=1 // pred_check
      _
    $region303: #{tpu_custom_call.1} parent=1 // pred_check_branch
      %624 = sbr.rel (%p621) target = $region305
    $region304: #{tpu_custom_call.1} parent=1 // pred_region
      %s643 = sand.u32 1, 7
      %p644 = scmp.eq.s32.totalorder %s643, 0
      %p645 = pneg %p644
      // Predicated region
      $region317: #{tpu_custom_call.1} parent=304 // pred_check
        _
      $region318: #{tpu_custom_call.1} parent=304 // pred_check_branch
        %647 = sbr.rel (%p644) target = $region320
      $region319: #{tpu_custom_call.1} parent=304 // pred_region
        %s648 = sand.u32 1, 7
        %s649 = ssub.s32 1, %s648
        %s650 = scalar_lea.vmem %s617, %s649
        %s651 = ssub.s32 1, %s648
        %s652 = scalar_lea.vmem %s618, %s651 [#allocation2]
        %s653 = sshllo.u32 0, %s648
        loop: start=0, step=1, limit=1
        $region321: #{tpu_custom_call.1} parent=319 // loop_pre_header
          _
        $region322: #{tpu_custom_call.1} parent=319 // loop_header
          %s655 = sphi 0, %s659
          %p656 = scmp.ge.s32.totalorder %s655, 1
          %s660 = sphi %s650, %s650
          %s661 = sphi %s652, %s652
        $region323: #{tpu_custom_call.1} parent=319 // loop_header_branch
          %658 = sbr.rel (%p656) target = $region327
        $region324: #{tpu_custom_call.1} parent=319 // loop_body
          %v662 = vld [vmem:[%s660] sm:%s653]
          %663 = vst [vmem:[%s661] sm:%s653] %v662
          %v664 = vld [vmem:[%s660 + $0x8] sm:%s653]
          %665 = vst [vmem:[%s661 + $0x8] sm:%s653] %v664
          %v666 = vld [vmem:[%s660 + $0x10] sm:%s653]
          %667 = vst [vmem:[%s661 + $0x10] sm:%s653] %v666
        $region325: #{tpu_custom_call.1} parent=319 // loop_footer
          %s659 = sadd.s32 1, %s655
        $region326: #{tpu_custom_call.1} parent=319 // loop_footer_branch
          %654 = sbr.rel target = $region322
        $region327: #{tpu_custom_call.1} parent=319 // loop_exit
          _
      $region320: #{tpu_custom_call.1} parent=304 // pred_fallthru
        _
    $region305: #{tpu_custom_call.1} parent=1 // pred_fallthru
      _
    // Predicated region
    $region306: #{tpu_custom_call.1} parent=1 // pred_check
      %p625 = pneg %p621
    $region307: #{tpu_custom_call.1} parent=1 // pred_check_branch
      %627 = sbr.rel (%p625) target = $region309
    $region308: #{tpu_custom_call.1} parent=1 // pred_region
      %s628 = sshllo.u32 0, 1
      loop: start=0, step=1, limit=1
      $region310: #{tpu_custom_call.1} parent=308 // loop_pre_header
        _
      $region311: #{tpu_custom_call.1} parent=308 // loop_header
        %s630 = sphi 0, %s634
        %p631 = scmp.ge.s32.totalorder %s630, 1
        %s635 = sphi %s617, %s617
        %s636 = sphi %s618, %s618
      $region312: #{tpu_custom_call.1} parent=308 // loop_header_branch
        %633 = sbr.rel (%p631) target = $region316
      $region313: #{tpu_custom_call.1} parent=308 // loop_body
        %v637 = vld [vmem:[%s635] sm:%s628]
        %638 = vst [vmem:[%s636] sm:%s628] %v637
        %v639 = vld [vmem:[%s635 + $0x8] sm:%s628]
        %640 = vst [vmem:[%s636 + $0x8] sm:%s628] %v639
        %v641 = vld [vmem:[%s635 + $0x10] sm:%s628]
        %642 = vst [vmem:[%s636 + $0x10] sm:%s628] %v641
      $region314: #{tpu_custom_call.1} parent=308 // loop_footer
        %s634 = sadd.s32 1, %s630
      $region315: #{tpu_custom_call.1} parent=308 // loop_footer_branch
        %629 = sbr.rel target = $region311
      $region316: #{tpu_custom_call.1} parent=308 // loop_exit
        _
    $region309: #{tpu_custom_call.1} parent=1 // pred_fallthru
      _
    // Predicated region
    $region328: #{tpu_custom_call.1} parent=1 // pred_check
      _
    $region329: #{tpu_custom_call.1} parent=1 // pred_check_branch
      %670 = sbr.rel (0) target = $region331
    $region330: #{tpu_custom_call.1} parent=1 // pred_region
      %671 = vsyncadd %s619, 48
    $region331: #{tpu_custom_call.1} parent=1 // pred_fallthru
      _
    %s672 = sld [smem:[#allocation5]]
    %s673 = sshrl.u32 %s672, 3
    %s674 = sand.u32 %s672, 7
    %s675 = smul.u32 %s673, 24
    %s676 = sadd.s32 %s674, %s675
    %s677 = scalar_lea.vmem %s1, %s676
    %s678 = scalar_lea.vmem [#allocation2], 27
    %s679 = scalar_lea.sflag [#allocation3], 11
    %p681 = scmp.lt.u32.totalorder 1, 8
    %p682 = pneg %p681
    // Predicated region
    $region332: #{tpu_custom_call.1} parent=1 // pred_check
      _
    $region333: #{tpu_custom_call.1} parent=1 // pred_check_branch
      %684 = sbr.rel (%p681) target = $region335
    $region334: #{tpu_custom_call.1} parent=1 // pred_region
      %s703 = sand.u32 1, 7
      %p704 = scmp.eq.s32.totalorder %s703, 0
      %p705 = pneg %p704
      // Predicated region
      $region347: #{tpu_custom_call.1} parent=334 // pred_check
        _
      $region348: #{tpu_custom_call.1} parent=334 // pred_check_branch
        %707 = sbr.rel (%p704) target = $region350
      $region349: #{tpu_custom_call.1} parent=334 // pred_region
        %s708 = sand.u32 1, 7
        %s709 = ssub.s32 1, %s708
        %s710 = scalar_lea.vmem %s677, %s709
        %s711 = ssub.s32 1, %s708
        %s712 = scalar_lea.vmem %s678, %s711 [#allocation2]
        %s713 = sshllo.u32 0, %s708
        loop: start=0, step=1, limit=1
        $region351: #{tpu_custom_call.1} parent=349 // loop_pre_header
          _
        $region352: #{tpu_custom_call.1} parent=349 // loop_header
          %s715 = sphi 0, %s719
          %p716 = scmp.ge.s32.totalorder %s715, 1
          %s720 = sphi %s710, %s710
          %s721 = sphi %s712, %s712
        $region353: #{tpu_custom_call.1} parent=349 // loop_header_branch
          %718 = sbr.rel (%p716) target = $region357
        $region354: #{tpu_custom_call.1} parent=349 // loop_body
          %v722 = vld [vmem:[%s720] sm:%s713]
          %723 = vst [vmem:[%s721] sm:%s713] %v722
          %v724 = vld [vmem:[%s720 + $0x8] sm:%s713]
          %725 = vst [vmem:[%s721 + $0x8] sm:%s713] %v724
          %v726 = vld [vmem:[%s720 + $0x10] sm:%s713]
          %727 = vst [vmem:[%s721 + $0x10] sm:%s713] %v726
        $region355: #{tpu_custom_call.1} parent=349 // loop_footer
          %s719 = sadd.s32 1, %s715
        $region356: #{tpu_custom_call.1} parent=349 // loop_footer_branch
          %714 = sbr.rel target = $region352
        $region357: #{tpu_custom_call.1} parent=349 // loop_exit
          _
      $region350: #{tpu_custom_call.1} parent=334 // pred_fallthru
        _
    $region335: #{tpu_custom_call.1} parent=1 // pred_fallthru
      _
    // Predicated region
    $region336: #{tpu_custom_call.1} parent=1 // pred_check
      %p685 = pneg %p681
    $region337: #{tpu_custom_call.1} parent=1 // pred_check_branch
      %687 = sbr.rel (%p685) target = $region339
    $region338: #{tpu_custom_call.1} parent=1 // pred_region
      %s688 = sshllo.u32 0, 1
      loop: start=0, step=1, limit=1
      $region340: #{tpu_custom_call.1} parent=338 // loop_pre_header
        _
      $region341: #{tpu_custom_call.1} parent=338 // loop_header
        %s690 = sphi 0, %s694
        %p691 = scmp.ge.s32.totalorder %s690, 1
        %s695 = sphi %s677, %s677
        %s696 = sphi %s678, %s678
      $region342: #{tpu_custom_call.1} parent=338 // loop_header_branch
        %693 = sbr.rel (%p691) target = $region346
      $region343: #{tpu_custom_call.1} parent=338 // loop_body
        %v697 = vld [vmem:[%s695] sm:%s688]
        %698 = vst [vmem:[%s696] sm:%s688] %v697
        %v699 = vld [vmem:[%s695 + $0x8] sm:%s688]
        %700 = vst [vmem:[%s696 + $0x8] sm:%s688] %v699
        %v701 = vld [vmem:[%s695 + $0x10] sm:%s688]
        %702 = vst [vmem:[%s696 + $0x10] sm:%s688] %v701
      $region344: #{tpu_custom_call.1} parent=338 // loop_footer
        %s694 = sadd.s32 1, %s690
      $region345: #{tpu_custom_call.1} parent=338 // loop_footer_branch
        %689 = sbr.rel target = $region341
      $region346: #{tpu_custom_call.1} parent=338 // loop_exit
        _
    $region339: #{tpu_custom_call.1} parent=1 // pred_fallthru
      _
    // Predicated region
    $region358: #{tpu_custom_call.1} parent=1 // pred_check
      _
    $region359: #{tpu_custom_call.1} parent=1 // pred_check_branch
      %730 = sbr.rel (0) target = $region361
    $region360: #{tpu_custom_call.1} parent=1 // pred_region
      %731 = vsyncadd %s679, 48
    $region361: #{tpu_custom_call.1} parent=1 // pred_fallthru
      _
    %s732 = sld [smem:[#allocation5]]
    %s733 = sshrl.u32 %s732, 3
    %s734 = sand.u32 %s732, 7
    %s735 = smul.u32 %s733, 24
    %s736 = sadd.s32 %s734, %s735
    %s737 = scalar_lea.vmem %s1, %s736
    %s738 = scalar_lea.vmem [#allocation2], 28
    %s739 = scalar_lea.sflag [#allocation3], 12
    %p741 = scmp.lt.u32.totalorder 1, 8
    %p742 = pneg %p741
    // Predicated region
    $region362: #{tpu_custom_call.1} parent=1 // pred_check
      _
    $region363: #{tpu_custom_call.1} parent=1 // pred_check_branch
      %744 = sbr.rel (%p741) target = $region365
    $region364: #{tpu_custom_call.1} parent=1 // pred_region
      %s763 = sand.u32 1, 7
      %p764 = scmp.eq.s32.totalorder %s763, 0
      %p765 = pneg %p764
      // Predicated region
      $region377: #{tpu_custom_call.1} parent=364 // pred_check
        _
      $region378: #{tpu_custom_call.1} parent=364 // pred_check_branch
        %767 = sbr.rel (%p764) target = $region380
      $region379: #{tpu_custom_call.1} parent=364 // pred_region
        %s768 = sand.u32 1, 7
        %s769 = ssub.s32 1, %s768
        %s770 = scalar_lea.vmem %s737, %s769
        %s771 = ssub.s32 1, %s768
        %s772 = scalar_lea.vmem %s738, %s771 [#allocation2]
        %s773 = sshllo.u32 0, %s768
        loop: start=0, step=1, limit=1
        $region381: #{tpu_custom_call.1} parent=379 // loop_pre_header
          _
        $region382: #{tpu_custom_call.1} parent=379 // loop_header
          %s775 = sphi 0, %s779
          %p776 = scmp.ge.s32.totalorder %s775, 1
          %s780 = sphi %s770, %s770
          %s781 = sphi %s772, %s772
        $region383: #{tpu_custom_call.1} parent=379 // loop_header_branch
          %778 = sbr.rel (%p776) target = $region387
        $region384: #{tpu_custom_call.1} parent=379 // loop_body
          %v782 = vld [vmem:[%s780] sm:%s773]
          %783 = vst [vmem:[%s781] sm:%s773] %v782
          %v784 = vld [vmem:[%s780 + $0x8] sm:%s773]
          %785 = vst [vmem:[%s781 + $0x8] sm:%s773] %v784
          %v786 = vld [vmem:[%s780 + $0x10] sm:%s773]
          %787 = vst [vmem:[%s781 + $0x10] sm:%s773] %v786
        $region385: #{tpu_custom_call.1} parent=379 // loop_footer
          %s779 = sadd.s32 1, %s775
        $region386: #{tpu_custom_call.1} parent=379 // loop_footer_branch
          %774 = sbr.rel target = $region382
        $region387: #{tpu_custom_call.1} parent=379 // loop_exit
          _
      $region380: #{tpu_custom_call.1} parent=364 // pred_fallthru
        _
    $region365: #{tpu_custom_call.1} parent=1 // pred_fallthru
      _
    // Predicated region
    $region366: #{tpu_custom_call.1} parent=1 // pred_check
      %p745 = pneg %p741
    $region367: #{tpu_custom_call.1} parent=1 // pred_check_branch
      %747 = sbr.rel (%p745) target = $region369
    $region368: #{tpu_custom_call.1} parent=1 // pred_region
      %s748 = sshllo.u32 0, 1
      loop: start=0, step=1, limit=1
      $region370: #{tpu_custom_call.1} parent=368 // loop_pre_header
        _
      $region371: #{tpu_custom_call.1} parent=368 // loop_header
        %s750 = sphi 0, %s754
        %p751 = scmp.ge.s32.totalorder %s750, 1
        %s755 = sphi %s737, %s737
        %s756 = sphi %s738, %s738
      $region372: #{tpu_custom_call.1} parent=368 // loop_header_branch
        %753 = sbr.rel (%p751) target = $region376
      $region373: #{tpu_custom_call.1} parent=368 // loop_body
        %v757 = vld [vmem:[%s755] sm:%s748]
        %758 = vst [vmem:[%s756] sm:%s748] %v757
        %v759 = vld [vmem:[%s755 + $0x8] sm:%s748]
        %760 = vst [vmem:[%s756 + $0x8] sm:%s748] %v759
        %v761 = vld [vmem:[%s755 + $0x10] sm:%s748]
        %762 = vst [vmem:[%s756 + $0x10] sm:%s748] %v761
      $region374: #{tpu_custom_call.1} parent=368 // loop_footer
        %s754 = sadd.s32 1, %s750
      $region375: #{tpu_custom_call.1} parent=368 // loop_footer_branch
        %749 = sbr.rel target = $region371
      $region376: #{tpu_custom_call.1} parent=368 // loop_exit
        _
    $region369: #{tpu_custom_call.1} parent=1 // pred_fallthru
      _
    // Predicated region
    $region388: #{tpu_custom_call.1} parent=1 // pred_check
      _
    $region389: #{tpu_custom_call.1} parent=1 // pred_check_branch
      %790 = sbr.rel (0) target = $region391
    $region390: #{tpu_custom_call.1} parent=1 // pred_region
      %791 = vsyncadd %s739, 48
    $region391: #{tpu_custom_call.1} parent=1 // pred_fallthru
      _
    %s792 = sld [smem:[#allocation5]]
    %s793 = sshrl.u32 %s792, 3
    %s794 = sand.u32 %s792, 7
    %s795 = smul.u32 %s793, 24
    %s796 = sadd.s32 %s794, %s795
    %s797 = scalar_lea.vmem %s1, %s796
    %s798 = scalar_lea.vmem [#allocation2], 29
    %s799 = scalar_lea.sflag [#allocation3], 13
    %p801 = scmp.lt.u32.totalorder 1, 8
    %p802 = pneg %p801
    // Predicated region
    $region392: #{tpu_custom_call.1} parent=1 // pred_check
      _
    $region393: #{tpu_custom_call.1} parent=1 // pred_check_branch
      %804 = sbr.rel (%p801) target = $region395
    $region394: #{tpu_custom_call.1} parent=1 // pred_region
      %s823 = sand.u32 1, 7
      %p824 = scmp.eq.s32.totalorder %s823, 0
      %p825 = pneg %p824
      // Predicated region
      $region407: #{tpu_custom_call.1} parent=394 // pred_check
        _
      $region408: #{tpu_custom_call.1} parent=394 // pred_check_branch
        %827 = sbr.rel (%p824) target = $region410
      $region409: #{tpu_custom_call.1} parent=394 // pred_region
        %s828 = sand.u32 1, 7
        %s829 = ssub.s32 1, %s828
        %s830 = scalar_lea.vmem %s797, %s829
        %s831 = ssub.s32 1, %s828
        %s832 = scalar_lea.vmem %s798, %s831 [#allocation2]
        %s833 = sshllo.u32 0, %s828
        loop: start=0, step=1, limit=1
        $region411: #{tpu_custom_call.1} parent=409 // loop_pre_header
          _
        $region412: #{tpu_custom_call.1} parent=409 // loop_header
          %s835 = sphi 0, %s839
          %p836 = scmp.ge.s32.totalorder %s835, 1
          %s840 = sphi %s830, %s830
          %s841 = sphi %s832, %s832
        $region413: #{tpu_custom_call.1} parent=409 // loop_header_branch
          %838 = sbr.rel (%p836) target = $region417
        $region414: #{tpu_custom_call.1} parent=409 // loop_body
          %v842 = vld [vmem:[%s840] sm:%s833]
          %843 = vst [vmem:[%s841] sm:%s833] %v842
          %v844 = vld [vmem:[%s840 + $0x8] sm:%s833]
          %845 = vst [vmem:[%s841 + $0x8] sm:%s833] %v844
          %v846 = vld [vmem:[%s840 + $0x10] sm:%s833]
          %847 = vst [vmem:[%s841 + $0x10] sm:%s833] %v846
        $region415: #{tpu_custom_call.1} parent=409 // loop_footer
          %s839 = sadd.s32 1, %s835
        $region416: #{tpu_custom_call.1} parent=409 // loop_footer_branch
          %834 = sbr.rel target = $region412
        $region417: #{tpu_custom_call.1} parent=409 // loop_exit
          _
      $region410: #{tpu_custom_call.1} parent=394 // pred_fallthru
        _
    $region395: #{tpu_custom_call.1} parent=1 // pred_fallthru
      _
    // Predicated region
    $region396: #{tpu_custom_call.1} parent=1 // pred_check
      %p805 = pneg %p801
    $region397: #{tpu_custom_call.1} parent=1 // pred_check_branch
      %807 = sbr.rel (%p805) target = $region399
    $region398: #{tpu_custom_call.1} parent=1 // pred_region
      %s808 = sshllo.u32 0, 1
      loop: start=0, step=1, limit=1
      $region400: #{tpu_custom_call.1} parent=398 // loop_pre_header
        _
      $region401: #{tpu_custom_call.1} parent=398 // loop_header
        %s810 = sphi 0, %s814
        %p811 = scmp.ge.s32.totalorder %s810, 1
        %s815 = sphi %s797, %s797
        %s816 = sphi %s798, %s798
      $region402: #{tpu_custom_call.1} parent=398 // loop_header_branch
        %813 = sbr.rel (%p811) target = $region406
      $region403: #{tpu_custom_call.1} parent=398 // loop_body
        %v817 = vld [vmem:[%s815] sm:%s808]
        %818 = vst [vmem:[%s816] sm:%s808] %v817
        %v819 = vld [vmem:[%s815 + $0x8] sm:%s808]
        %820 = vst [vmem:[%s816 + $0x8] sm:%s808] %v819
        %v821 = vld [vmem:[%s815 + $0x10] sm:%s808]
        %822 = vst [vmem:[%s816 + $0x10] sm:%s808] %v821
      $region404: #{tpu_custom_call.1} parent=398 // loop_footer
        %s814 = sadd.s32 1, %s810
      $region405: #{tpu_custom_call.1} parent=398 // loop_footer_branch
        %809 = sbr.rel target = $region401
      $region406: #{tpu_custom_call.1} parent=398 // loop_exit
        _
    $region399: #{tpu_custom_call.1} parent=1 // pred_fallthru
      _
    // Predicated region
    $region418: #{tpu_custom_call.1} parent=1 // pred_check
      _
    $region419: #{tpu_custom_call.1} parent=1 // pred_check_branch
      %850 = sbr.rel (0) target = $region421
    $region420: #{tpu_custom_call.1} parent=1 // pred_region
      %851 = vsyncadd %s799, 48
    $region421: #{tpu_custom_call.1} parent=1 // pred_fallthru
      _
    %s852 = sld [smem:[#allocation5]]
    %s853 = sshrl.u32 %s852, 3
    %s854 = sand.u32 %s852, 7
    %s855 = smul.u32 %s853, 24
    %s856 = sadd.s32 %s854, %s855
    %s857 = scalar_lea.vmem %s1, %s856
    %s858 = scalar_lea.vmem [#allocation2], 30
    %s859 = scalar_lea.sflag [#allocation3], 14
    %p861 = scmp.lt.u32.totalorder 1, 8
    %p862 = pneg %p861
    // Predicated region
    $region422: #{tpu_custom_call.1} parent=1 // pred_check
      _
    $region423: #{tpu_custom_call.1} parent=1 // pred_check_branch
      %864 = sbr.rel (%p861) target = $region425
    $region424: #{tpu_custom_call.1} parent=1 // pred_region
      %s883 = sand.u32 1, 7
      %p884 = scmp.eq.s32.totalorder %s883, 0
      %p885 = pneg %p884
      // Predicated region
      $region437: #{tpu_custom_call.1} parent=424 // pred_check
        _
      $region438: #{tpu_custom_call.1} parent=424 // pred_check_branch
        %887 = sbr.rel (%p884) target = $region440
      $region439: #{tpu_custom_call.1} parent=424 // pred_region
        %s888 = sand.u32 1, 7
        %s889 = ssub.s32 1, %s888
        %s890 = scalar_lea.vmem %s857, %s889
        %s891 = ssub.s32 1, %s888
        %s892 = scalar_lea.vmem %s858, %s891 [#allocation2]
        %s893 = sshllo.u32 0, %s888
        loop: start=0, step=1, limit=1
        $region441: #{tpu_custom_call.1} parent=439 // loop_pre_header
          _
        $region442: #{tpu_custom_call.1} parent=439 // loop_header
          %s895 = sphi 0, %s899
          %p896 = scmp.ge.s32.totalorder %s895, 1
          %s900 = sphi %s890, %s890
          %s901 = sphi %s892, %s892
        $region443: #{tpu_custom_call.1} parent=439 // loop_header_branch
          %898 = sbr.rel (%p896) target = $region447
        $region444: #{tpu_custom_call.1} parent=439 // loop_body
          %v902 = vld [vmem:[%s900] sm:%s893]
          %903 = vst [vmem:[%s901] sm:%s893] %v902
          %v904 = vld [vmem:[%s900 + $0x8] sm:%s893]
          %905 = vst [vmem:[%s901 + $0x8] sm:%s893] %v904
          %v906 = vld [vmem:[%s900 + $0x10] sm:%s893]
          %907 = vst [vmem:[%s901 + $0x10] sm:%s893] %v906
        $region445: #{tpu_custom_call.1} parent=439 // loop_footer
          %s899 = sadd.s32 1, %s895
        $region446: #{tpu_custom_call.1} parent=439 // loop_footer_branch
          %894 = sbr.rel target = $region442
        $region447: #{tpu_custom_call.1} parent=439 // loop_exit
          _
      $region440: #{tpu_custom_call.1} parent=424 // pred_fallthru
        _
    $region425: #{tpu_custom_call.1} parent=1 // pred_fallthru
      _
    // Predicated region
    $region426: #{tpu_custom_call.1} parent=1 // pred_check
      %p865 = pneg %p861
    $region427: #{tpu_custom_call.1} parent=1 // pred_check_branch
      %867 = sbr.rel (%p865) target = $region429
    $region428: #{tpu_custom_call.1} parent=1 // pred_region
      %s868 = sshllo.u32 0, 1
      loop: start=0, step=1, limit=1
      $region430: #{tpu_custom_call.1} parent=428 // loop_pre_header
        _
      $region431: #{tpu_custom_call.1} parent=428 // loop_header
        %s870 = sphi 0, %s874
        %p871 = scmp.ge.s32.totalorder %s870, 1
        %s875 = sphi %s857, %s857
        %s876 = sphi %s858, %s858
      $region432: #{tpu_custom_call.1} parent=428 // loop_header_branch
        %873 = sbr.rel (%p871) target = $region436
      $region433: #{tpu_custom_call.1} parent=428 // loop_body
        %v877 = vld [vmem:[%s875] sm:%s868]
        %878 = vst [vmem:[%s876] sm:%s868] %v877
        %v879 = vld [vmem:[%s875 + $0x8] sm:%s868]
        %880 = vst [vmem:[%s876 + $0x8] sm:%s868] %v879
        %v881 = vld [vmem:[%s875 + $0x10] sm:%s868]
        %882 = vst [vmem:[%s876 + $0x10] sm:%s868] %v881
      $region434: #{tpu_custom_call.1} parent=428 // loop_footer
        %s874 = sadd.s32 1, %s870
      $region435: #{tpu_custom_call.1} parent=428 // loop_footer_branch
        %869 = sbr.rel target = $region431
      $region436: #{tpu_custom_call.1} parent=428 // loop_exit
        _
    $region429: #{tpu_custom_call.1} parent=1 // pred_fallthru
      _
    // Predicated region
    $region448: #{tpu_custom_call.1} parent=1 // pred_check
      _
    $region449: #{tpu_custom_call.1} parent=1 // pred_check_branch
      %910 = sbr.rel (0) target = $region451
    $region450: #{tpu_custom_call.1} parent=1 // pred_region
      %911 = vsyncadd %s859, 48
    $region451: #{tpu_custom_call.1} parent=1 // pred_fallthru
      _
    %s912 = sld [smem:[#allocation5]]
    %s913 = sshrl.u32 %s912, 3
    %s914 = sand.u32 %s912, 7
    %s915 = smul.u32 %s913, 24
    %s916 = sadd.s32 %s914, %s915
    %s917 = scalar_lea.vmem %s1, %s916
    %s918 = scalar_lea.vmem [#allocation2], 31
    %s919 = scalar_lea.sflag [#allocation3], 15
    %p921 = scmp.lt.u32.totalorder 1, 8
    %p922 = pneg %p921
    // Predicated region
    $region452: #{tpu_custom_call.1} parent=1 // pred_check
      _
    $region453: #{tpu_custom_call.1} parent=1 // pred_check_branch
      %924 = sbr.rel (%p921) target = $region455
    $region454: #{tpu_custom_call.1} parent=1 // pred_region
      %s943 = sand.u32 1, 7
      %p944 = scmp.eq.s32.totalorder %s943, 0
      %p945 = pneg %p944
      // Predicated region
      $region467: #{tpu_custom_call.1} parent=454 // pred_check
        _
      $region468: #{tpu_custom_call.1} parent=454 // pred_check_branch
        %947 = sbr.rel (%p944) target = $region470
      $region469: #{tpu_custom_call.1} parent=454 // pred_region
        %s948 = sand.u32 1, 7
        %s949 = ssub.s32 1, %s948
        %s950 = scalar_lea.vmem %s917, %s949
        %s951 = ssub.s32 1, %s948
        %s952 = scalar_lea.vmem %s918, %s951 [#allocation2]
        %s953 = sshllo.u32 0, %s948
        loop: start=0, step=1, limit=1
        $region471: #{tpu_custom_call.1} parent=469 // loop_pre_header
          _
        $region472: #{tpu_custom_call.1} parent=469 // loop_header
          %s955 = sphi 0, %s959
          %p956 = scmp.ge.s32.totalorder %s955, 1
          %s960 = sphi %s950, %s950
          %s961 = sphi %s952, %s952
        $region473: #{tpu_custom_call.1} parent=469 // loop_header_branch
          %958 = sbr.rel (%p956) target = $region477
        $region474: #{tpu_custom_call.1} parent=469 // loop_body
          %v962 = vld [vmem:[%s960] sm:%s953]
          %963 = vst [vmem:[%s961] sm:%s953] %v962
          %v964 = vld [vmem:[%s960 + $0x8] sm:%s953]
          %965 = vst [vmem:[%s961 + $0x8] sm:%s953] %v964
          %v966 = vld [vmem:[%s960 + $0x10] sm:%s953]
          %967 = vst [vmem:[%s961 + $0x10] sm:%s953] %v966
        $region475: #{tpu_custom_call.1} parent=469 // loop_footer
          %s959 = sadd.s32 1, %s955
        $region476: #{tpu_custom_call.1} parent=469 // loop_footer_branch
          %954 = sbr.rel target = $region472
        $region477: #{tpu_custom_call.1} parent=469 // loop_exit
          _
      $region470: #{tpu_custom_call.1} parent=454 // pred_fallthru
        _
    $region455: #{tpu_custom_call.1} parent=1 // pred_fallthru
      _
    // Predicated region
    $region456: #{tpu_custom_call.1} parent=1 // pred_check
      %p925 = pneg %p921
    $region457: #{tpu_custom_call.1} parent=1 // pred_check_branch
      %927 = sbr.rel (%p925) target = $region459
    $region458: #{tpu_custom_call.1} parent=1 // pred_region
      %s928 = sshllo.u32 0, 1
      loop: start=0, step=1, limit=1
      $region460: #{tpu_custom_call.1} parent=458 // loop_pre_header
        _
      $region461: #{tpu_custom_call.1} parent=458 // loop_header
        %s930 = sphi 0, %s934
        %p931 = scmp.ge.s32.totalorder %s930, 1
        %s935 = sphi %s917, %s917
        %s936 = sphi %s918, %s918
      $region462: #{tpu_custom_call.1} parent=458 // loop_header_branch
        %933 = sbr.rel (%p931) target = $region466
      $region463: #{tpu_custom_call.1} parent=458 // loop_body
        %v937 = vld [vmem:[%s935] sm:%s928]
        %938 = vst [vmem:[%s936] sm:%s928] %v937
        %v939 = vld [vmem:[%s935 + $0x8] sm:%s928]
        %940 = vst [vmem:[%s936 + $0x8] sm:%s928] %v939
        %v941 = vld [vmem:[%s935 + $0x10] sm:%s928]
        %942 = vst [vmem:[%s936 + $0x10] sm:%s928] %v941
      $region464: #{tpu_custom_call.1} parent=458 // loop_footer
        %s934 = sadd.s32 1, %s930
      $region465: #{tpu_custom_call.1} parent=458 // loop_footer_branch
        %929 = sbr.rel target = $region461
      $region466: #{tpu_custom_call.1} parent=458 // loop_exit
        _
    $region459: #{tpu_custom_call.1} parent=1 // pred_fallthru
      _
    // Predicated region
    $region478: #{tpu_custom_call.1} parent=1 // pred_check
      _
    $region479: #{tpu_custom_call.1} parent=1 // pred_check_branch
      %970 = sbr.rel (0) target = $region481
    $region480: #{tpu_custom_call.1} parent=1 // pred_region
      %971 = vsyncadd %s919, 48
    $region481: #{tpu_custom_call.1} parent=1 // pred_fallthru
      _
    %s972 = smul.u32 1, 3
    %s973 = sshll.u32 %s972, 4
    %974 = dma.done [#allocation3], %s973
    %s975 = sshll.u32 %s972, 4
    %976 = dma.done %s79, %s975
    %s977 = sshll.u32 %s972, 4
    %978 = dma.done %s139, %s977
    %s979 = sshll.u32 %s972, 4
    %980 = dma.done %s199, %s979
    %s981 = sshll.u32 %s972, 4
    %982 = dma.done %s259, %s981
    %s983 = sshll.u32 %s972, 4
    %984 = dma.done %s319, %s983
    %s985 = sshll.u32 %s972, 4
    %986 = dma.done %s379, %s985
    %s987 = sshll.u32 %s972, 4
    %988 = dma.done %s439, %s987
    %s989 = sshll.u32 %s972, 4
    %990 = dma.done %s499, %s989
    %s991 = sshll.u32 %s972, 4
    %992 = dma.done %s559, %s991
    %s993 = sshll.u32 %s972, 4
    %994 = dma.done %s619, %s993
    %s995 = sshll.u32 %s972, 4
    %996 = dma.done %s679, %s995
    %s997 = sshll.u32 %s972, 4
    %998 = dma.done %s739, %s997
    %s999 = sshll.u32 %s972, 4
    %1000 = dma.done %s799, %s999
    %s1001 = sshll.u32 %s972, 4
    %1002 = dma.done %s859, %s1001
    %s1003 = sshll.u32 %s972, 4
    %1004 = dma.done %s919, %s1003
    %v1005 = vld [vmem:[#allocation2] sm:$0xff]
    %v1006 = vld [vmem:[#allocation2 + $0x8] sm:$0xff]
    %v1007 = vld [vmem:[#allocation2 + $0x10] sm:$0xff]
    %v1008 = vld [vmem:[#allocation2 + $0x18] sm:$0xff]
    %v1009 = vld [vmem:[#allocation2 + $0x20] sm:$0xff]
    %v1010 = vld [vmem:[#allocation2 + $0x28] sm:$0xff]
    %v1011 = vmul.f32 %v1005, %v1005
    %v1012 = vmul.f32 %v1006, %v1006
    %v1013 = vmul.f32 %v1007, %v1007
    %v1014 = vmul.f32 %v1008, %v1008
    %v1015 = vmul.f32 %v1009, %v1009
    %v1016 = vmul.f32 %v1010, %v1010
    %v1017 = vadd.f32 %v1011, %v1012
    %vm1018 = vcmask 359424
    %v1019 = vsel %vm1018, %v1013, 0.0
    %v1020 = vadd.f32 %v1017, %v1019
    %1021 = vadd.xlane.f32.xlu0 %v1020
    %v1022 = vpop.xlane.xlu0 %1021
    %v1023 = vadd.f32 %v1014, %v1015
    %v1024 = vsel %vm1018, %v1016, 0.0
    %v1025 = vadd.f32 %v1023, %v1024
    %1026 = vadd.xlane.f32.xlu0 %v1025
    %v1027 = vpop.xlane.xlu0 %1026
    %v1028 = vrsqrt.pop %v1022
    %v1029 = vmul.f32 %v1022, %v1028
    %vm1030 = vcmp.eq.f32.partialorder %v1022, inf
    %v1031 = vsel %vm1030, %v1022, %v1029
    %vm1032 = vcmp.eq.f32.partialorder %v1022, 0.0
    %v1033 = vand.u32 %v1022, 2147483648
    %v1034 = vsel %vm1032, %v1033, %v1031
    %v1035 = vrsqrt.pop %v1027
    %v1036 = vmul.f32 %v1027, %v1035
    %vm1037 = vcmp.eq.f32.partialorder %v1027, inf
    %v1038 = vsel %vm1037, %v1027, %v1036
    %vm1039 = vcmp.eq.f32.partialorder %v1027, 0.0
    %v1040 = vand.u32 %v1027, 2147483648
    %v1041 = vsel %vm1039, %v1040, %v1038
    %vm1042 = vcmp.gt.f32.partialorder %v1034, 1.0
    %vm1043 = vcmp.gt.f32.partialorder %v1041, 1.0
    %v1044 = vadd.f32 %v1034, 1e-07
    %v1045 = vadd.f32 %v1041, 1e-07
    %v1046 = vrcp.pop %v1044
    %v1047 = vmul.f32 1.0, %v1046
    %v1048 = vrcp.pop %v1045
    %v1049 = vmul.f32 1.0, %v1048
    %v1050 = vsel %vm1042, %v1047, 1.0
    %v1051 = vsel %vm1043, %v1049, 1.0
    %v1052 = vmul.f32 %v1005, %v1050
    %v1053 = vmul.f32 %v1006, %v1050
    %v1054 = vmul.f32 %v1007, %v1050
    %v1055 = vmul.f32 %v1008, %v1051
    %v1056 = vmul.f32 %v1009, %v1051
    %v1057 = vmul.f32 %v1010, %v1051
    %1058 = vst [vmem:[#allocation6] sm:$0xff] %v1052
    %1059 = vst [vmem:[#allocation6 + $0x8] sm:$0xff] %v1053
    %1060 = vst.msk [vmem:[#allocation6 + $0x10] sm:$0xff] %vm1018, %v1054
    %1061 = vst [vmem:[#allocation6 + $0x18] sm:$0xff] %v1055
    %1062 = vst [vmem:[#allocation6 + $0x20] sm:$0xff] %v1056
    %1063 = vst.msk [vmem:[#allocation6 + $0x28] sm:$0xff] %vm1018, %v1057
    // Predicated region
    $region482: #{tpu_custom_call.1} parent=1 // pred_check
      _
    $region483: #{tpu_custom_call.1} parent=1 // pred_check_branch
      %1065 = sbr.rel (0) target = $region485
    $region484: #{tpu_custom_call.1} parent=1 // pred_region
      %s1067 = ssub.s32 768, 768
      %1068 = vsyncadd [#allocation7], %s1067
      %s1069 = sshll.u32 [#allocation6], 4
      %s1070 = int_to_ptr.vmem [resolvable:$true] %s1069
      %1075 = dma.vmem_to_hbm [thread:$0]  %s1070, 768, %s2, [#allocation7], 384, 384, 24
    $region485: #{tpu_custom_call.1} parent=1 // pred_fallthru
      _
    // Predicated region
    $region486: #{tpu_custom_call.1} parent=1 // pred_check
      _
    $region487: #{tpu_custom_call.1} parent=1 // pred_check_branch
      %1077 = sbr.rel (0) target = $region489
    $region488: #{tpu_custom_call.1} parent=1 // pred_region
      %1078 = dma.done [#allocation7], 768
    $region489: #{tpu_custom_call.1} parent=1 // pred_fallthru
      _
    %1079 = vsyncpa [#allocation7], 1
  %1080 = vsyncmov [#allocation3]
  %s1081 = vpop.sfrf %1080
  %p1082 = scmp.eq.s32.totalorder %s1081, 0
  %p1083 = pneg %p1082
  %1085 = shalt.err (%p1083)
  %s1086 = scalar_lea.sflag [#allocation3], 1
  %1087 = vsyncmov %s1086
  %s1088 = vpop.sfrf %1087
  %p1089 = scmp.eq.s32.totalorder %s1088, 0
  %p1090 = pneg %p1089
  %1092 = shalt.err (%p1090)
  %s1093 = scalar_lea.sflag [#allocation3], 2
  %1094 = vsyncmov %s1093
  %s1095 = vpop.sfrf %1094
  %p1096 = scmp.eq.s32.totalorder %s1095, 0
  %p1097 = pneg %p1096
  %1099 = shalt.err (%p1097)
  %s1100 = scalar_lea.sflag [#allocation3], 3
  %1101 = vsyncmov %s1100
  %s1102 = vpop.sfrf %1101
  %p1103 = scmp.eq.s32.totalorder %s1102, 0
  %p1104 = pneg %p1103
  %1106 = shalt.err (%p1104)
  %s1107 = scalar_lea.sflag [#allocation3], 4
  %1108 = vsyncmov %s1107
  %s1109 = vpop.sfrf %1108
  %p1110 = scmp.eq.s32.totalorder %s1109, 0
  %p1111 = pneg %p1110
  %1113 = shalt.err (%p1111)
  %s1114 = scalar_lea.sflag [#allocation3], 5
  %1115 = vsyncmov %s1114
  %s1116 = vpop.sfrf %1115
  %p1117 = scmp.eq.s32.totalorder %s1116, 0
  %p1118 = pneg %p1117
  %1120 = shalt.err (%p1118)
  %s1121 = scalar_lea.sflag [#allocation3], 6
  %1122 = vsyncmov %s1121
  %s1123 = vpop.sfrf %1122
  %p1124 = scmp.eq.s32.totalorder %s1123, 0
  %p1125 = pneg %p1124
  %1127 = shalt.err (%p1125)
  %s1128 = scalar_lea.sflag [#allocation3], 7
  %1129 = vsyncmov %s1128
  %s1130 = vpop.sfrf %1129
  %p1131 = scmp.eq.s32.totalorder %s1130, 0
  %p1132 = pneg %p1131
  %1134 = shalt.err (%p1132)
  %s1135 = scalar_lea.sflag [#allocation3], 8
  %1136 = vsyncmov %s1135
  %s1137 = vpop.sfrf %1136
  %p1138 = scmp.eq.s32.totalorder %s1137, 0
  %p1139 = pneg %p1138
  %1141 = shalt.err (%p1139)
  %s1142 = scalar_lea.sflag [#allocation3], 9
  %1143 = vsyncmov %s1142
  %s1144 = vpop.sfrf %1143
  %p1145 = scmp.eq.s32.totalorder %s1144, 0
  %p1146 = pneg %p1145
  %1148 = shalt.err (%p1146)
  %s1149 = scalar_lea.sflag [#allocation3], 10
  %1150 = vsyncmov %s1149
  %s1151 = vpop.sfrf %1150
  %p1152 = scmp.eq.s32.totalorder %s1151, 0
  %p1153 = pneg %p1152
  %1155 = shalt.err (%p1153)
  %s1156 = scalar_lea.sflag [#allocation3], 11
  %1157 = vsyncmov %s1156
  %s1158 = vpop.sfrf %1157
  %p1159 = scmp.eq.s32.totalorder %s1158, 0
  %p1160 = pneg %p1159
  %1162 = shalt.err (%p1160)
  %s1163 = scalar_lea.sflag [#allocation3], 12
  %1164 = vsyncmov %s1163
  %s1165 = vpop.sfrf %1164
  %p1166 = scmp.eq.s32.totalorder %s1165, 0
  %p1167 = pneg %p1166
  %1169 = shalt.err (%p1167)
  %s1170 = scalar_lea.sflag [#allocation3], 13
  %1171 = vsyncmov %s1170
  %s1172 = vpop.sfrf %1171
  %p1173 = scmp.eq.s32.totalorder %s1172, 0
  %p1174 = pneg %p1173
  %1176 = shalt.err (%p1174)
  %s1177 = scalar_lea.sflag [#allocation3], 14
  %1178 = vsyncmov %s1177
  %s1179 = vpop.sfrf %1178
  %p1180 = scmp.eq.s32.totalorder %s1179, 0
  %p1181 = pneg %p1180
  %1183 = shalt.err (%p1181)
  %s1184 = scalar_lea.sflag [#allocation3], 15
  %1185 = vsyncmov %s1184
  %s1186 = vpop.sfrf %1185
  %p1187 = scmp.eq.s32.totalorder %s1186, 0
  %p1188 = pneg %p1187
  %1190 = shalt.err (%p1188)

</llo_original>
